<compile_context>
chip_gen: v7x
topology: tpu7x:2x2x1
jax: 0.10.0
libtpu: 0.0.40
codegen_flags: <defaults>
</compile_context>

<pallas_src>
import functools

import jax
import jax.numpy as jnp
from jax import lax
from jax.experimental import pallas as pl
from jax.experimental.pallas import tpu as pltpu


# ----------------------------------------------------------------------------
# Fused kernel: per-batch Q/K/V projections (all heads at once), per-head
# attention, concat in VMEM scratch, and the output projection.
# ----------------------------------------------------------------------------
def _mha_fused_kernel(q_in_ref, k_in_ref, v_in_ref,
                      wq_ref, wk_ref, wv_ref,
                      bq_ref, bk_ref, bv_ref,
                      wo_ref, bo_ref,
                      o_ref,
                      concat_ref,
                      *, attn_type: str, scaled: bool,
                      num_heads: int, dim_q: int, dim_k: int):
    # Activations for this batch element, cast once to bf16 for the MXU.
    xq = q_in_ref[0].astype(jnp.bfloat16)          # (S, dim_in)
    xk = k_in_ref[0].astype(jnp.bfloat16)
    xv = v_in_ref[0].astype(jnp.bfloat16)

    # Fused per-head projections: x @ W + b.  W is already (dim_in, H*d) bf16.
    q_all = jnp.dot(xq, wq_ref[...], preferred_element_type=jnp.float32) + bq_ref[...]
    k_all = jnp.dot(xk, wk_ref[...], preferred_element_type=jnp.float32) + bk_ref[...]
    v_all = jnp.dot(xv, wv_ref[...], preferred_element_type=jnp.float32) + bv_ref[...]

    inv_scale = (1.0 / (dim_q ** 0.5)) if scaled else 1.0

    # Hoist the bf16 casts (and, for dot-product, the softmax scale folded into q)
    # out of the head loop: one cast/mul over (S, H*d) instead of H small ones.
    # The cosine path must normalize per head in f32 first, so it casts inside.
    if attn_type != "cosine":
        q_all = (q_all * inv_scale).astype(jnp.bfloat16)
        k_all = k_all.astype(jnp.bfloat16)
    v_all_bf = v_all.astype(jnp.bfloat16)

    for h in range(num_heads):                     # small H, static unroll
        q_h = q_all[:, h * dim_q:(h + 1) * dim_q]  # (S, dim_q)
        k_h = k_all[:, h * dim_k:(h + 1) * dim_k]  # (S, dim_k)
        v_h = v_all_bf[:, h * dim_k:(h + 1) * dim_k]

        if attn_type == "cosine":
            # f32 normalization (eps avoids NaN/Inf for near-zero rows), then
            # fold the softmax scale into the small q operand and cast for MXU.
            q_h = q_h * lax.rsqrt(jnp.sum(q_h * q_h, axis=-1, keepdims=True) + 1e-12)
            k_h = k_h * lax.rsqrt(jnp.sum(k_h * k_h, axis=-1, keepdims=True) + 1e-12)
            q_h = (q_h * inv_scale).astype(jnp.bfloat16)
            k_h = k_h.astype(jnp.bfloat16)

        # scores = (q_h * inv_scale) @ k_h^T, contracting last dims (no transpose)
        scores = lax.dot_general(
            q_h, k_h, dimension_numbers=(((1,), (1,)), ((), ())),
            preferred_element_type=jnp.float32)    # (S, S) f32

        # numerically-stable softmax kept in f32; denominator on the EUP
        m = jnp.max(scores, axis=-1, keepdims=True)
        e = jnp.exp(scores - m)
        p = e * pl.reciprocal(jnp.sum(e, axis=-1, keepdims=True), approx=True)

        out_h = jnp.dot(p.astype(jnp.bfloat16), v_h,
                        preferred_element_type=jnp.float32)  # (S, dim_k)
        # write directly into concatenated layout (== torch.cat(dim=-1))
        concat_ref[:, h * dim_k:(h + 1) * dim_k] = out_h

    # fused output projection: concat @ Wo^T + bo (Wo^T already pre-transposed bf16)
    y = jnp.dot(concat_ref[...].astype(jnp.bfloat16), wo_ref[...],
                preferred_element_type=jnp.float32) + bo_ref[...]
    o_ref[0] = y.astype(o_ref.dtype)


# ----------------------------------------------------------------------------
# Wrapper
# ----------------------------------------------------------------------------
def multi_head_attention(query, key, value, params, *,
                         attn_type: str = "dot_product", scaled: bool = True):
    """query/key/value: (B, S, dim_in) float32.  params: dict of stacked weights."""
    B, S, dim_in = query.shape
    wq, wk, wv = params["wq"], params["wk"], params["wv"]   # (H, d_out, dim_in)
    bq, bk, bv = params["bq"], params["bk"], params["bv"]   # (H, d_out)
    wo, bo = params["wo"], params["bo"]                     # (dim_in, H*dim_k), (dim_in,)

    H, dim_q, _ = wq.shape
    dim_k = wk.shape[1]

    # One-time host-side re-layout: heads stacked along output columns,
    # pre-transposed so the kernel computes x @ W, pre-cast to bf16 for the MXU.
    def stack_heads_t(w):             # (H, d_out, dim_in) -> (dim_in, H*d_out)
        return jnp.transpose(w, (2, 0, 1)).reshape(dim_in, H * w.shape[1])

    wq_all = stack_heads_t(wq).astype(jnp.bfloat16)
    wk_all = stack_heads_t(wk).astype(jnp.bfloat16)
    wv_all = stack_heads_t(wv).astype(jnp.bfloat16)
    bq_all = bq.reshape(1, H * dim_q).astype(jnp.float32)
    bk_all = bk.reshape(1, H * dim_k).astype(jnp.float32)
    bv_all = bv.reshape(1, H * dim_k).astype(jnp.float32)
    wo_t = wo.T.astype(jnp.bfloat16)                        # (H*dim_k, dim_in)
    bo2 = bo.reshape(1, dim_in).astype(jnp.float32)

    kernel = functools.partial(
        _mha_fused_kernel, attn_type=attn_type, scaled=scaled,
        num_heads=H, dim_q=dim_q, dim_k=dim_k)

    # TODO(synk): for large S, tile the K/V axis flash-style (online softmax) so the
    # (S, S) score tile stays inside the v7x 64 MiB VMEM budget.
    return pl.pallas_call(
        kernel,
        out_shape=jax.ShapeDtypeStruct((B, S, dim_in), jnp.float32),
        grid_spec=pltpu.PrefetchScalarGridSpec(
            num_scalar_prefetch=0,
            grid=(B,),
            in_specs=[
                pl.BlockSpec((1, S, dim_in), lambda b: (b, 0, 0)),      # query
                pl.BlockSpec((1, S, dim_in), lambda b: (b, 0, 0)),      # key
                pl.BlockSpec((1, S, dim_in), lambda b: (b, 0, 0)),      # value
                pl.BlockSpec((dim_in, H * dim_q), lambda b: (0, 0)),    # Wq (stacked,T,bf16)
                pl.BlockSpec((dim_in, H * dim_k), lambda b: (0, 0)),    # Wk
                pl.BlockSpec((dim_in, H * dim_k), lambda b: (0, 0)),    # Wv
                pl.BlockSpec((1, H * dim_q), lambda b: (0, 0)),         # bq
                pl.BlockSpec((1, H * dim_k), lambda b: (0, 0)),         # bk
                pl.BlockSpec((1, H * dim_k), lambda b: (0, 0)),         # bv
                pl.BlockSpec((H * dim_k, dim_in), lambda b: (0, 0)),    # Wo^T (bf16)
                pl.BlockSpec((1, dim_in), lambda b: (0, 0)),            # bo
            ],
            out_specs=pl.BlockSpec((1, S, dim_in), lambda b: (b, 0, 0)),
            scratch_shapes=[pltpu.VMEM((S, H * dim_k), jnp.float32)],
        ),
        compiler_params=pltpu.CompilerParams(
            dimension_semantics=("parallel",),
            vmem_limit_bytes=32 * 1024 * 1024),
    )(query, key, value, wq_all, wk_all, wv_all, bq_all, bk_all, bv_all, wo_t, bo2)


# ----------------------------------------------------------------------------
# Deterministic parameter init (synthetic weights, nn.Linear shapes)
# ----------------------------------------------------------------------------
def init_params(key, num_heads, dim_in, dim_q, dim_k):
    ks = jax.random.split(key, 8)

    def u(k, shape, fan_in):
        bound = 1.0 / (fan_in ** 0.5)
        return jax.random.uniform(k, shape, jnp.float32, -bound, bound)

    return {
        "wq": u(ks[0], (num_heads, dim_q, dim_in), dim_in),
        "bq": u(ks[1], (num_heads, dim_q), dim_in),
        "wk": u(ks[2], (num_heads, dim_k, dim_in), dim_in),
        "bk": u(ks[3], (num_heads, dim_k), dim_in),
        "wv": u(ks[4], (num_heads, dim_k, dim_in), dim_in),
        "bv": u(ks[5], (num_heads, dim_k), dim_in),
        "wo": u(ks[6], (dim_in, num_heads * dim_k), num_heads * dim_k),
        "bo": u(ks[7], (dim_in,), num_heads * dim_k),
    }


# Pure-JAX f32 reference (mirrors the PyTorch module)
def reference(query, key, value, params, *, attn_type, scaled):
    wq, wk, wv = params["wq"], params["wk"], params["wv"]
    bq, bk, bv = params["bq"], params["bk"], params["bv"]
    H = wq.shape[0]
    dim_q = wq.shape[1]
    outs = []
    for h in range(H):
        q = query @ wq[h].T + bq[h]
        k = key @ wk[h].T + bk[h]
        v = value @ wv[h].T + bv[h]
        if attn_type == "cosine":
            q = q / jnp.linalg.norm(q, axis=-1)[:, :, None]
            k = k / jnp.linalg.norm(k, axis=-1)[:, :, None]
        scale = dim_q ** 0.5 if scaled else 1.0
        s = jnp.einsum("bqd,bkd->bqk", q, k) / scale
        p = jax.nn.softmax(s, axis=-1)
        outs.append(jnp.einsum("bqk,bkd->bqd", p, v))
    cat = jnp.concatenate(outs, axis=-1)
    return cat @ params["wo"].T + params["bo"]


if __name__ == "__main__":
    B, S, dim_in = 2, 8, 32
    num_heads, dim_q, dim_k = 4, 16, 16
    scaled = True

    key = jax.random.PRNGKey(0)
    kq, kk, kv, kp = jax.random.split(key, 4)
    query = jax.random.normal(kq, (B, S, dim_in), jnp.float32)
    key_t = jax.random.normal(kk, (B, S, dim_in), jnp.float32)
    value = jax.random.normal(kv, (B, S, dim_in), jnp.float32)
    params = init_params(kp, num_heads, dim_in, dim_q, dim_k)

    for attn_type in ("dot_product", "cosine"):
        out = multi_head_attention(query, key_t, value, params,
                                   attn_type=attn_type, scaled=scaled)
        out = jax.block_until_ready(out)
        ref = reference(query, key_t, value, params,
                        attn_type=attn_type, scaled=scaled)
        assert out.shape == (B, S, dim_in)
        # bf16 MXU operands + f32 accumulation -> loosened tolerance vs f32 reference
        assert jnp.allclose(out, ref, atol=2e-2, rtol=2e-2), f"mismatch ({attn_type})"

    print("KERNEL_OK")
</pallas_src>

<mosaic_0001>
module attributes {stable_mosaic.version = 11 : i64} {
  func.func @_mha_fused_kernel(%arg0: i32, %arg1: memref<1x8x32xf32, #tpu.memory_space<vmem>>, %arg2: memref<1x8x32xf32, #tpu.memory_space<vmem>>, %arg3: memref<1x8x32xf32, #tpu.memory_space<vmem>>, %arg4: memref<32x64xbf16, #tpu.memory_space<vmem>>, %arg5: memref<32x64xbf16, #tpu.memory_space<vmem>>, %arg6: memref<32x64xbf16, #tpu.memory_space<vmem>>, %arg7: memref<1x64xf32, #tpu.memory_space<vmem>>, %arg8: memref<1x64xf32, #tpu.memory_space<vmem>>, %arg9: memref<1x64xf32, #tpu.memory_space<vmem>>, %arg10: memref<64x32xbf16, #tpu.memory_space<vmem>>, %arg11: memref<1x32xf32, #tpu.memory_space<vmem>>, %arg12: memref<1x8x32xf32, #tpu.memory_space<vmem>>, %arg13: memref<8x64xf32, #tpu.memory_space<vmem>>) attributes {dimension_semantics = [#tpu.dimension_semantics<parallel>], iteration_bounds = array<i64: 2>, scalar_prefetch = 0 : i64, scratch_operands = 1 : i64, tpu.core_type = #tpu.core_type<tc>, window_params = [{transform_indices = @transform_0, window_bounds = array<i64: 1, 8, 32>}, {transform_indices = @transform_1, window_bounds = array<i64: 1, 8, 32>}, {transform_indices = @transform_2, window_bounds = array<i64: 1, 8, 32>}, {pipeline_mode = #tpu.pipeline_mode<synchronous>, transform_indices = @transform_3, window_bounds = array<i64: 32, 64>}, {pipeline_mode = #tpu.pipeline_mode<synchronous>, transform_indices = @transform_4, window_bounds = array<i64: 32, 64>}, {pipeline_mode = #tpu.pipeline_mode<synchronous>, transform_indices = @transform_5, window_bounds = array<i64: 32, 64>}, {pipeline_mode = #tpu.pipeline_mode<synchronous>, transform_indices = @transform_6, window_bounds = array<i64: 1, 64>}, {pipeline_mode = #tpu.pipeline_mode<synchronous>, transform_indices = @transform_7, window_bounds = array<i64: 1, 64>}, {pipeline_mode = #tpu.pipeline_mode<synchronous>, transform_indices = @transform_8, window_bounds = array<i64: 1, 64>}, {pipeline_mode = #tpu.pipeline_mode<synchronous>, transform_indices = @transform_9, window_bounds = array<i64: 64, 32>}, {pipeline_mode = #tpu.pipeline_mode<synchronous>, transform_indices = @transform_10, window_bounds = array<i64: 1, 32>}, {transform_indices = @transform_11, window_bounds = array<i64: 1, 8, 32>}]} {
    %c0 = arith.constant 0 : index
    %c0_0 = arith.constant 0 : index
    %c0_1 = arith.constant 0 : index
    %0 = vector.load %arg1[%c0, %c0_0, %c0_1] : memref<1x8x32xf32, #tpu.memory_space<vmem>>, vector<1x8x32xf32>
    %1 = vector.shape_cast %0 : vector<1x8x32xf32> to vector<8x32xf32>
    %2 = arith.truncf %1 : vector<8x32xf32> to vector<8x32xbf16>
    %c0_2 = arith.constant 0 : index
    %c0_3 = arith.constant 0 : index
    %c0_4 = arith.constant 0 : index
    %3 = vector.load %arg2[%c0_2, %c0_3, %c0_4] : memref<1x8x32xf32, #tpu.memory_space<vmem>>, vector<1x8x32xf32>
    %4 = vector.shape_cast %3 : vector<1x8x32xf32> to vector<8x32xf32>
    %5 = arith.truncf %4 : vector<8x32xf32> to vector<8x32xbf16>
    %c0_5 = arith.constant 0 : index
    %c0_6 = arith.constant 0 : index
    %c0_7 = arith.constant 0 : index
    %6 = vector.load %arg3[%c0_5, %c0_6, %c0_7] : memref<1x8x32xf32, #tpu.memory_space<vmem>>, vector<1x8x32xf32>
    %7 = vector.shape_cast %6 : vector<1x8x32xf32> to vector<8x32xf32>
    %8 = arith.truncf %7 : vector<8x32xf32> to vector<8x32xbf16>
    %c0_8 = arith.constant 0 : index
    %c0_9 = arith.constant 0 : index
    %9 = vector.load %arg4[%c0_8, %c0_9] : memref<32x64xbf16, #tpu.memory_space<vmem>>, vector<32x64xbf16>
    %cst = arith.constant dense<0.000000e+00> : vector<8x64xf32>
    %10 = tpu.matmul %2, %9, %cst {dimension_numbers = #tpu.dot_dimension_numbers<[1], [0], [0], [1], [0, 0, 1, 1], [], []>} : vector<8x32xbf16>, vector<32x64xbf16>, vector<8x64xf32> -> vector<8x64xf32>
    %c0_10 = arith.constant 0 : index
    %c0_11 = arith.constant 0 : index
    %11 = vector.load %arg7[%c0_10, %c0_11] : memref<1x64xf32, #tpu.memory_space<vmem>>, vector<1x64xf32>
    %12 = vector.broadcast %11 : vector<1x64xf32> to vector<8x64xf32>
    %13 = arith.addf %10, %12 : vector<8x64xf32>
    %c0_12 = arith.constant 0 : index
    %c0_13 = arith.constant 0 : index
    %14 = vector.load %arg5[%c0_12, %c0_13] : memref<32x64xbf16, #tpu.memory_space<vmem>>, vector<32x64xbf16>
    %cst_14 = arith.constant dense<0.000000e+00> : vector<8x64xf32>
    %15 = tpu.matmul %5, %14, %cst_14 {dimension_numbers = #tpu.dot_dimension_numbers<[1], [0], [0], [1], [0, 0, 1, 1], [], []>} : vector<8x32xbf16>, vector<32x64xbf16>, vector<8x64xf32> -> vector<8x64xf32>
    %c0_15 = arith.constant 0 : index
    %c0_16 = arith.constant 0 : index
    %16 = vector.load %arg8[%c0_15, %c0_16] : memref<1x64xf32, #tpu.memory_space<vmem>>, vector<1x64xf32>
    %17 = vector.broadcast %16 : vector<1x64xf32> to vector<8x64xf32>
    %18 = arith.addf %15, %17 : vector<8x64xf32>
    %c0_17 = arith.constant 0 : index
    %c0_18 = arith.constant 0 : index
    %19 = vector.load %arg6[%c0_17, %c0_18] : memref<32x64xbf16, #tpu.memory_space<vmem>>, vector<32x64xbf16>
    %cst_19 = arith.constant dense<0.000000e+00> : vector<8x64xf32>
    %20 = tpu.matmul %8, %19, %cst_19 {dimension_numbers = #tpu.dot_dimension_numbers<[1], [0], [0], [1], [0, 0, 1, 1], [], []>} : vector<8x32xbf16>, vector<32x64xbf16>, vector<8x64xf32> -> vector<8x64xf32>
    %c0_20 = arith.constant 0 : index
    %c0_21 = arith.constant 0 : index
    %21 = vector.load %arg9[%c0_20, %c0_21] : memref<1x64xf32, #tpu.memory_space<vmem>>, vector<1x64xf32>
    %22 = vector.broadcast %21 : vector<1x64xf32> to vector<8x64xf32>
    %23 = arith.addf %20, %22 : vector<8x64xf32>
    %cst_22 = arith.constant 2.500000e-01 : f32
    %24 = vector.broadcast %cst_22 : f32 to vector<8x64xf32>
    %25 = arith.mulf %13, %24 : vector<8x64xf32>
    %26 = arith.truncf %25 : vector<8x64xf32> to vector<8x64xbf16>
    %27 = arith.truncf %18 : vector<8x64xf32> to vector<8x64xbf16>
    %28 = arith.truncf %23 : vector<8x64xf32> to vector<8x64xbf16>
    %29 = vector.extract_strided_slice %26 {offsets = [0, 0], sizes = [8, 16], strides = [1, 1]} : vector<8x64xbf16> to vector<8x16xbf16>
    %30 = vector.extract_strided_slice %27 {offsets = [0, 0], sizes = [8, 16], strides = [1, 1]} : vector<8x64xbf16> to vector<8x16xbf16>
    %31 = vector.extract_strided_slice %28 {offsets = [0, 0], sizes = [8, 16], strides = [1, 1]} : vector<8x64xbf16> to vector<8x16xbf16>
    %cst_23 = arith.constant dense<0.000000e+00> : vector<8x8xf32>
    %32 = tpu.matmul %29, %30, %cst_23 {dimension_numbers = #tpu.dot_dimension_numbers<[1], [1], [0], [0], [0, 0, 1, 0], [], []>} : vector<8x16xbf16>, vector<8x16xbf16>, vector<8x8xf32> -> vector<8x8xf32>
    %cst_24 = arith.constant dense<0xFF800000> : vector<8xf32>
    %33 = vector.multi_reduction <maximumf>, %32, %cst_24 [1] : vector<8x8xf32> to vector<8xf32>
    %34 = vector.shape_cast %33 : vector<8xf32> to vector<8x1xf32>
    %35 = vector.broadcast %34 : vector<8x1xf32> to vector<8x8xf32>
    %36 = arith.subf %32, %35 : vector<8x8xf32>
    %37 = math.exp %36 : vector<8x8xf32>
    %cst_25 = arith.constant dense<0.000000e+00> : vector<8xf32>
    %38 = vector.multi_reduction <add>, %37, %cst_25 [1] : vector<8x8xf32> to vector<8xf32>
    %39 = vector.shape_cast %38 : vector<8xf32> to vector<8x1xf32>
    %40 = tpu.reciprocal %39 {approx = true} : vector<8x1xf32> -> vector<8x1xf32>
    %41 = vector.broadcast %40 : vector<8x1xf32> to vector<8x8xf32>
    %42 = arith.mulf %37, %41 : vector<8x8xf32>
    %43 = arith.truncf %42 : vector<8x8xf32> to vector<8x8xbf16>
    %cst_26 = arith.constant dense<0.000000e+00> : vector<8x16xf32>
    %44 = tpu.matmul %43, %31, %cst_26 {dimension_numbers = #tpu.dot_dimension_numbers<[1], [0], [0], [1], [0, 0, 1, 1], [], []>} : vector<8x8xbf16>, vector<8x16xbf16>, vector<8x16xf32> -> vector<8x16xf32>
    %c0_27 = arith.constant 0 : index
    %c0_28 = arith.constant 0 : index
    %45 = vector.load %arg13[%c0_27, %c0_28] : memref<8x64xf32, #tpu.memory_space<vmem>>, vector<8x16xf32>
    tpu.vector_store %arg13[%c0_27, %c0_28], %44 {strides = array<i32>} : memref<8x64xf32, #tpu.memory_space<vmem>>, vector<8x16xf32>,
    %46 = vector.extract_strided_slice %26 {offsets = [0, 16], sizes = [8, 16], strides = [1, 1]} : vector<8x64xbf16> to vector<8x16xbf16>
    %47 = vector.extract_strided_slice %27 {offsets = [0, 16], sizes = [8, 16], strides = [1, 1]} : vector<8x64xbf16> to vector<8x16xbf16>
    %48 = vector.extract_strided_slice %28 {offsets = [0, 16], sizes = [8, 16], strides = [1, 1]} : vector<8x64xbf16> to vector<8x16xbf16>
    %cst_29 = arith.constant dense<0.000000e+00> : vector<8x8xf32>
    %49 = tpu.matmul %46, %47, %cst_29 {dimension_numbers = #tpu.dot_dimension_numbers<[1], [1], [0], [0], [0, 0, 1, 0], [], []>} : vector<8x16xbf16>, vector<8x16xbf16>, vector<8x8xf32> -> vector<8x8xf32>
    %cst_30 = arith.constant dense<0xFF800000> : vector<8xf32>
    %50 = vector.multi_reduction <maximumf>, %49, %cst_30 [1] : vector<8x8xf32> to vector<8xf32>
    %51 = vector.shape_cast %50 : vector<8xf32> to vector<8x1xf32>
    %52 = vector.broadcast %51 : vector<8x1xf32> to vector<8x8xf32>
    %53 = arith.subf %49, %52 : vector<8x8xf32>
    %54 = math.exp %53 : vector<8x8xf32>
    %cst_31 = arith.constant dense<0.000000e+00> : vector<8xf32>
    %55 = vector.multi_reduction <add>, %54, %cst_31 [1] : vector<8x8xf32> to vector<8xf32>
    %56 = vector.shape_cast %55 : vector<8xf32> to vector<8x1xf32>
    %57 = tpu.reciprocal %56 {approx = true} : vector<8x1xf32> -> vector<8x1xf32>
    %58 = vector.broadcast %57 : vector<8x1xf32> to vector<8x8xf32>
    %59 = arith.mulf %54, %58 : vector<8x8xf32>
    %60 = arith.truncf %59 : vector<8x8xf32> to vector<8x8xbf16>
    %cst_32 = arith.constant dense<0.000000e+00> : vector<8x16xf32>
    %61 = tpu.matmul %60, %48, %cst_32 {dimension_numbers = #tpu.dot_dimension_numbers<[1], [0], [0], [1], [0, 0, 1, 1], [], []>} : vector<8x8xbf16>, vector<8x16xbf16>, vector<8x16xf32> -> vector<8x16xf32>
    %c0_33 = arith.constant 0 : index
    %c16 = arith.constant 16 : index
    %62 = vector.load %arg13[%c0_33, %c16] : memref<8x64xf32, #tpu.memory_space<vmem>>, vector<8x16xf32>
    tpu.vector_store %arg13[%c0_33, %c16], %61 {strides = array<i32>} : memref<8x64xf32, #tpu.memory_space<vmem>>, vector<8x16xf32>,
    %63 = vector.extract_strided_slice %26 {offsets = [0, 32], sizes = [8, 16], strides = [1, 1]} : vector<8x64xbf16> to vector<8x16xbf16>
    %64 = vector.extract_strided_slice %27 {offsets = [0, 32], sizes = [8, 16], strides = [1, 1]} : vector<8x64xbf16> to vector<8x16xbf16>
    %65 = vector.extract_strided_slice %28 {offsets = [0, 32], sizes = [8, 16], strides = [1, 1]} : vector<8x64xbf16> to vector<8x16xbf16>
    %cst_34 = arith.constant dense<0.000000e+00> : vector<8x8xf32>
    %66 = tpu.matmul %63, %64, %cst_34 {dimension_numbers = #tpu.dot_dimension_numbers<[1], [1], [0], [0], [0, 0, 1, 0], [], []>} : vector<8x16xbf16>, vector<8x16xbf16>, vector<8x8xf32> -> vector<8x8xf32>
    %cst_35 = arith.constant dense<0xFF800000> : vector<8xf32>
    %67 = vector.multi_reduction <maximumf>, %66, %cst_35 [1] : vector<8x8xf32> to vector<8xf32>
    %68 = vector.shape_cast %67 : vector<8xf32> to vector<8x1xf32>
    %69 = vector.broadcast %68 : vector<8x1xf32> to vector<8x8xf32>
    %70 = arith.subf %66, %69 : vector<8x8xf32>
    %71 = math.exp %70 : vector<8x8xf32>
    %cst_36 = arith.constant dense<0.000000e+00> : vector<8xf32>
    %72 = vector.multi_reduction <add>, %71, %cst_36 [1] : vector<8x8xf32> to vector<8xf32>
    %73 = vector.shape_cast %72 : vector<8xf32> to vector<8x1xf32>
    %74 = tpu.reciprocal %73 {approx = true} : vector<8x1xf32> -> vector<8x1xf32>
    %75 = vector.broadcast %74 : vector<8x1xf32> to vector<8x8xf32>
    %76 = arith.mulf %71, %75 : vector<8x8xf32>
    %77 = arith.truncf %76 : vector<8x8xf32> to vector<8x8xbf16>
    %cst_37 = arith.constant dense<0.000000e+00> : vector<8x16xf32>
    %78 = tpu.matmul %77, %65, %cst_37 {dimension_numbers = #tpu.dot_dimension_numbers<[1], [0], [0], [1], [0, 0, 1, 1], [], []>} : vector<8x8xbf16>, vector<8x16xbf16>, vector<8x16xf32> -> vector<8x16xf32>
    %c0_38 = arith.constant 0 : index
    %c32 = arith.constant 32 : index
    %79 = vector.load %arg13[%c0_38, %c32] : memref<8x64xf32, #tpu.memory_space<vmem>>, vector<8x16xf32>
    tpu.vector_store %arg13[%c0_38, %c32], %78 {strides = array<i32>} : memref<8x64xf32, #tpu.memory_space<vmem>>, vector<8x16xf32>,
    %80 = vector.extract_strided_slice %26 {offsets = [0, 48], sizes = [8, 16], strides = [1, 1]} : vector<8x64xbf16> to vector<8x16xbf16>
    %81 = vector.extract_strided_slice %27 {offsets = [0, 48], sizes = [8, 16], strides = [1, 1]} : vector<8x64xbf16> to vector<8x16xbf16>
    %82 = vector.extract_strided_slice %28 {offsets = [0, 48], sizes = [8, 16], strides = [1, 1]} : vector<8x64xbf16> to vector<8x16xbf16>
    %cst_39 = arith.constant dense<0.000000e+00> : vector<8x8xf32>
    %83 = tpu.matmul %80, %81, %cst_39 {dimension_numbers = #tpu.dot_dimension_numbers<[1], [1], [0], [0], [0, 0, 1, 0], [], []>} : vector<8x16xbf16>, vector<8x16xbf16>, vector<8x8xf32> -> vector<8x8xf32>
    %cst_40 = arith.constant dense<0xFF800000> : vector<8xf32>
    %84 = vector.multi_reduction <maximumf>, %83, %cst_40 [1] : vector<8x8xf32> to vector<8xf32>
    %85 = vector.shape_cast %84 : vector<8xf32> to vector<8x1xf32>
    %86 = vector.broadcast %85 : vector<8x1xf32> to vector<8x8xf32>
    %87 = arith.subf %83, %86 : vector<8x8xf32>
    %88 = math.exp %87 : vector<8x8xf32>
    %cst_41 = arith.constant dense<0.000000e+00> : vector<8xf32>
    %89 = vector.multi_reduction <add>, %88, %cst_41 [1] : vector<8x8xf32> to vector<8xf32>
    %90 = vector.shape_cast %89 : vector<8xf32> to vector<8x1xf32>
    %91 = tpu.reciprocal %90 {approx = true} : vector<8x1xf32> -> vector<8x1xf32>
    %92 = vector.broadcast %91 : vector<8x1xf32> to vector<8x8xf32>
    %93 = arith.mulf %88, %92 : vector<8x8xf32>
    %94 = arith.truncf %93 : vector<8x8xf32> to vector<8x8xbf16>
    %cst_42 = arith.constant dense<0.000000e+00> : vector<8x16xf32>
    %95 = tpu.matmul %94, %82, %cst_42 {dimension_numbers = #tpu.dot_dimension_numbers<[1], [0], [0], [1], [0, 0, 1, 1], [], []>} : vector<8x8xbf16>, vector<8x16xbf16>, vector<8x16xf32> -> vector<8x16xf32>
    %c0_43 = arith.constant 0 : index
    %c48 = arith.constant 48 : index
    %96 = vector.load %arg13[%c0_43, %c48] : memref<8x64xf32, #tpu.memory_space<vmem>>, vector<8x16xf32>
    tpu.vector_store %arg13[%c0_43, %c48], %95 {strides = array<i32>} : memref<8x64xf32, #tpu.memory_space<vmem>>, vector<8x16xf32>,
    %c0_44 = arith.constant 0 : index
    %c0_45 = arith.constant 0 : index
    %97 = vector.load %arg13[%c0_44, %c0_45] : memref<8x64xf32, #tpu.memory_space<vmem>>, vector<8x64xf32>
    %98 = arith.truncf %97 : vector<8x64xf32> to vector<8x64xbf16>
    %c0_46 = arith.constant 0 : index
    %c0_47 = arith.constant 0 : index
    %99 = vector.load %arg10[%c0_46, %c0_47] : memref<64x32xbf16, #tpu.memory_space<vmem>>, vector<64x32xbf16>
    %cst_48 = arith.constant dense<0.000000e+00> : vector<8x32xf32>
    %100 = tpu.matmul %98, %99, %cst_48 {dimension_numbers = #tpu.dot_dimension_numbers<[1], [0], [0], [1], [0, 0, 1, 1], [], []>} : vector<8x64xbf16>, vector<64x32xbf16>, vector<8x32xf32> -> vector<8x32xf32>
    %c0_49 = arith.constant 0 : index
    %c0_50 = arith.constant 0 : index
    %101 = vector.load %arg11[%c0_49, %c0_50] : memref<1x32xf32, #tpu.memory_space<vmem>>, vector<1x32xf32>
    %102 = vector.broadcast %101 : vector<1x32xf32> to vector<8x32xf32>
    %103 = arith.addf %100, %102 : vector<8x32xf32>
    %c0_51 = arith.constant 0 : index
    %c0_52 = arith.constant 0 : index
    %c0_53 = arith.constant 0 : index
    %104 = vector.load %arg12[%c0_51, %c0_52, %c0_53] : memref<1x8x32xf32, #tpu.memory_space<vmem>>, vector<1x8x32xf32>
    %105 = vector.shape_cast %104 : vector<1x8x32xf32> to vector<8x32xf32>
    %106 = vector.shape_cast %103 : vector<8x32xf32> to vector<1x8x32xf32>
    tpu.vector_store %arg12[%c0_51, %c0_52, %c0_53], %106 {strides = array<i32>} : memref<1x8x32xf32, #tpu.memory_space<vmem>>, vector<1x8x32xf32>,
    return
  }
  func.func @transform_0(%arg0: i32) -> (i32, i32, i32) {
    %c0_i32 = arith.constant 0 : i32
    %c0_i32_0 = arith.constant 0 : i32
    %c0_i32_1 = arith.constant 0 : i32
    return %arg0, %c0_i32, %c0_i32_0 : i32, i32, i32
  }
  func.func @transform_1(%arg0: i32) -> (i32, i32, i32) {
    %c0_i32 = arith.constant 0 : i32
    %c0_i32_0 = arith.constant 0 : i32
    %c0_i32_1 = arith.constant 0 : i32
    return %arg0, %c0_i32, %c0_i32_0 : i32, i32, i32
  }
  func.func @transform_2(%arg0: i32) -> (i32, i32, i32) {
    %c0_i32 = arith.constant 0 : i32
    %c0_i32_0 = arith.constant 0 : i32
    %c0_i32_1 = arith.constant 0 : i32
    return %arg0, %c0_i32, %c0_i32_0 : i32, i32, i32
  }
  func.func @transform_3(%arg0: i32) -> (i32, i32) {
    %c0_i32 = arith.constant 0 : i32
    %c0_i32_0 = arith.constant 0 : i32
    %c0_i32_1 = arith.constant 0 : i32
    return %c0_i32, %c0_i32_0 : i32, i32
  }
  func.func @transform_4(%arg0: i32) -> (i32, i32) {
    %c0_i32 = arith.constant 0 : i32
    %c0_i32_0 = arith.constant 0 : i32
    %c0_i32_1 = arith.constant 0 : i32
    return %c0_i32, %c0_i32_0 : i32, i32
  }
  func.func @transform_5(%arg0: i32) -> (i32, i32) {
    %c0_i32 = arith.constant 0 : i32
    %c0_i32_0 = arith.constant 0 : i32
    %c0_i32_1 = arith.constant 0 : i32
    return %c0_i32, %c0_i32_0 : i32, i32
  }
  func.func @transform_6(%arg0: i32) -> (i32, i32) {
    %c0_i32 = arith.constant 0 : i32
    %c0_i32_0 = arith.constant 0 : i32
    %c0_i32_1 = arith.constant 0 : i32
    return %c0_i32, %c0_i32_0 : i32, i32
  }
  func.func @transform_7(%arg0: i32) -> (i32, i32) {
    %c0_i32 = arith.constant 0 : i32
    %c0_i32_0 = arith.constant 0 : i32
    %c0_i32_1 = arith.constant 0 : i32
    return %c0_i32, %c0_i32_0 : i32, i32
  }
  func.func @transform_8(%arg0: i32) -> (i32, i32) {
    %c0_i32 = arith.constant 0 : i32
    %c0_i32_0 = arith.constant 0 : i32
    %c0_i32_1 = arith.constant 0 : i32
    return %c0_i32, %c0_i32_0 : i32, i32
  }
  func.func @transform_9(%arg0: i32) -> (i32, i32) {
    %c0_i32 = arith.constant 0 : i32
    %c0_i32_0 = arith.constant 0 : i32
    %c0_i32_1 = arith.constant 0 : i32
    return %c0_i32, %c0_i32_0 : i32, i32
  }
  func.func @transform_10(%arg0: i32) -> (i32, i32) {
    %c0_i32 = arith.constant 0 : i32
    %c0_i32_0 = arith.constant 0 : i32
    %c0_i32_1 = arith.constant 0 : i32
    return %c0_i32, %c0_i32_0 : i32, i32
  }
  func.func @transform_11(%arg0: i32) -> (i32, i32, i32) {
    %c0_i32 = arith.constant 0 : i32
    %c0_i32_0 = arith.constant 0 : i32
    %c0_i32_1 = arith.constant 0 : i32
    return %arg0, %c0_i32, %c0_i32_0 : i32, i32, i32
  }
}

</mosaic_0001>

<llo_original>
// kernel: tpu_custom_call.1
$region0: #{tpu_custom_call.1}
  #allocation0 [shape = 'u32[]', space=smem, size = 0x4, offset = 0x4, fixed_abs, tag = 'smem constant byte address 0x4 - core index']
  #allocation1 [shape = 'u32[144,128]{1,0:T(1,128)}', space=vmem, size = 0x12000, scoped, tag = 'internal scratch']
  #allocation2 [shape = 'f32[8,64]{1,0:T(8,128)}', space=vmem, size = 0x1000, scoped, tag = 'scratch operand']
  %s0 = inlined_call_operand.vmem [shape: f32[2,8,32], index: 0, kind: input, shape index: {}]
  %s1 = inlined_call_operand.vmem [shape: f32[2,8,32], index: 1, kind: input, shape index: {}]
  %s2 = inlined_call_operand.vmem [shape: f32[2,8,32], index: 2, kind: input, shape index: {}]
  %s3 = inlined_call_operand.hbm [shape: bf16[32,64], index: 3, kind: input, shape index: {}]
  %s4 = inlined_call_operand.hbm [shape: bf16[32,64], index: 4, kind: input, shape index: {}]
  %s5 = inlined_call_operand.hbm [shape: bf16[32,64], index: 5, kind: input, shape index: {}]
  %s6 = inlined_call_operand.vmem [shape: f32[1,64], index: 6, kind: input, shape index: {}]
  %s7 = inlined_call_operand.vmem [shape: f32[1,64], index: 7, kind: input, shape index: {}]
  %s8 = inlined_call_operand.vmem [shape: f32[1,64], index: 8, kind: input, shape index: {}]
  %s9 = inlined_call_operand.vmem [shape: bf16[64,32], index: 9, kind: input, shape index: {}]
  %s10 = inlined_call_operand.vmem [shape: f32[1,32], index: 10, kind: input, shape index: {}]
  %s11 = inlined_call_operand.hbm [shape: f32[2,8,32], index: 11, kind: output, shape index: {}]
  %s12 = sld [smem:[#allocation0]]
  $region89: #{tpu_custom_call.1} parent=0
    _
  %s14 = ssub.s32 1, %s12
  %s15 = scalar_select 0, %s14, %s12
  $region1: #{tpu_custom_call.1} parent=0
    #allocation3 [shape = 'u8[8192]{0}', space=vmem, size = 0x2000, scoped, tag = 'input window, operand 3, single buffered']
    #allocation4 [shape = 's32[2]{0}', space=sflag, size = 0x8, scoped, tag = 'scoped memory for tpu_custom_call.1']
    #allocation5 [shape = 's32[2]{0}', space=sflag, size = 0x8, scoped, tag = 'scoped memory for tpu_custom_call.1']
    #allocation6 [shape = 'u8[8192]{0}', space=vmem, size = 0x2000, scoped, tag = 'input window, operand 4, single buffered']
    #allocation7 [shape = 's32[1]{0}', space=sflag, size = 0x4, scoped, tag = 'scoped memory for tpu_custom_call.1']
    #allocation8 [shape = 'u8[8192]{0}', space=vmem, size = 0x2000, scoped, tag = 'input window, operand 5, single buffered']
    #allocation9 [shape = 'u8[8192]{0}', space=vmem, size = 0x2000, scoped, tag = 'output window, operand 0']
    %16 = vsyncpa [#allocation4], 0
    %17 = vsyncpa [#allocation7], 0
    %18 = vsyncpa [#allocation5], 0
    %s19 = scalar_lea.sflag [#allocation5], 1
    %20 = vsyncpa %s19, 0
    loop: start=0, step=1, limit=4
    $region2: #{tpu_custom_call.1} parent=1 // loop_pre_header
      _
    $region3: #{tpu_custom_call.1} parent=1 // loop_header
      %s22 = sphi 0, %s26
      %p23 = scmp.ge.s32.totalorder %s22, 4
      %s32 = sphi 0, %s34
      %s35 = sphi 0, %s32
      %s36 = sphi 0, %s35
      %s52 = sphi 0, %s36
      %s58 = sphi 0, %s60
      %s61 = sphi 0, %s58
      %s62 = sphi 0, %s61
      %s78 = sphi 0, %s62
      %s84 = sphi 0, %s86
      %s87 = sphi 0, %s84
      %s88 = sphi 0, %s87
      %s104 = sphi 0, %s88
      %s108 = sphi 0, %s108
      %s110 = sphi 0, %s108
      %s111 = sphi 0, %s110
      %s125 = sphi 0, %s111
      %s129 = sphi 0, %s129
      %s131 = sphi 0, %s129
      %s132 = sphi 0, %s131
      %s146 = sphi 0, %s132
      %s150 = sphi 0, %s150
      %s152 = sphi 0, %s150
      %s153 = sphi 0, %s152
      %s167 = sphi 0, %s153
      %s171 = sphi 0, %s171
      %s173 = sphi 0, %s171
      %s174 = sphi 0, %s173
      %s188 = sphi 0, %s174
      %s192 = sphi 0, %s192
      %s194 = sphi 0, %s192
      %s195 = sphi 0, %s194
      %s209 = sphi 0, %s195
      %s213 = sphi 0, %s213
      %s215 = sphi 0, %s213
      %s216 = sphi 0, %s215
      %s230 = sphi 0, %s216
      %s234 = sphi 0, %s234
      %s236 = sphi 0, %s234
      %s237 = sphi 0, %s236
      %s251 = sphi 0, %s237
      %s255 = sphi 0, %s255
      %s257 = sphi 0, %s255
      %s258 = sphi 0, %s257
      %s272 = sphi 0, %s258
      %s278 = sphi 0, %s280
      %s281 = sphi 0, %s278
      %s282 = sphi 0, %s281
      %s298 = sphi 0, %s282
    $region4: #{tpu_custom_call.1} parent=1 // loop_header_branch
      %25 = sbr.rel (%p23) target = $region8
    $region5: #{tpu_custom_call.1} parent=1 // loop_body
      %s27 = ssub.s32 %s22, 1
      %s28 = ssub.s32 %s22, 2
      %s29 = sadd.s32 %s22, 1
      %s30 = ssub.s32 %s22, %s29
      %p31 = scmp.eq.s32.totalorder %s30, 0
      %s33 = sadd.s32 %s32, 1
      %s34 = scalar_select %p31, %s32, %s33
      %p37 = pneg %p31
      %p38 = scmp.eq.s32.totalorder %s22, 1
      %p39 = por %p37, %p38
      %p40 = scmp.ne.s32.totalorder %s32, %s35
      %p41 = scmp.eq.s32.totalorder %s22, 0
      %p42 = por %p40, %p41
      %p43 = scmp.ne.s32.totalorder %s32, %s35
      %p44 = scmp.eq.s32.totalorder %s27, 1
      %p45 = por %p43, %p44
      %p46 = scmp.ne.s32.totalorder %s35, %s36
      %p47 = scmp.eq.s32.totalorder %s27, 0
      %p48 = por %p46, %p47
      %p49 = scmp.ne.s32.totalorder %s35, %s36
      %p50 = scmp.eq.s32.totalorder %s28, 1
      %p51 = por %p49, %p50
      %p53 = scmp.ne.s32.totalorder %s36, %s52
      %p54 = scmp.eq.s32.totalorder %s28, 0
      %p55 = por %p53, %p54
      %s56 = ssub.s32 %s22, %s29
      %p57 = scmp.eq.s32.totalorder %s56, 0
      %s59 = sadd.s32 %s58, 1
      %s60 = scalar_select %p57, %s58, %s59
      %p63 = pneg %p57
      %p64 = scmp.eq.s32.totalorder %s22, 1
      %p65 = por %p63, %p64
      %p66 = scmp.ne.s32.totalorder %s58, %s61
      %p67 = scmp.eq.s32.totalorder %s22, 0
      %p68 = por %p66, %p67
      %p69 = scmp.ne.s32.totalorder %s58, %s61
      %p70 = scmp.eq.s32.totalorder %s27, 1
      %p71 = por %p69, %p70
      %p72 = scmp.ne.s32.totalorder %s61, %s62
      %p73 = scmp.eq.s32.totalorder %s27, 0
      %p74 = por %p72, %p73
      %p75 = scmp.ne.s32.totalorder %s61, %s62
      %p76 = scmp.eq.s32.totalorder %s28, 1
      %p77 = por %p75, %p76
      %p79 = scmp.ne.s32.totalorder %s62, %s78
      %p80 = scmp.eq.s32.totalorder %s28, 0
      %p81 = por %p79, %p80
      %s82 = ssub.s32 %s22, %s29
      %p83 = scmp.eq.s32.totalorder %s82, 0
      %s85 = sadd.s32 %s84, 1
      %s86 = scalar_select %p83, %s84, %s85
      %p89 = pneg %p83
      %p90 = scmp.eq.s32.totalorder %s22, 1
      %p91 = por %p89, %p90
      %p92 = scmp.ne.s32.totalorder %s84, %s87
      %p93 = scmp.eq.s32.totalorder %s22, 0
      %p94 = por %p92, %p93
      %p95 = scmp.ne.s32.totalorder %s84, %s87
      %p96 = scmp.eq.s32.totalorder %s27, 1
      %p97 = por %p95, %p96
      %p98 = scmp.ne.s32.totalorder %s87, %s88
      %p99 = scmp.eq.s32.totalorder %s27, 0
      %p100 = por %p98, %p99
      %p101 = scmp.ne.s32.totalorder %s87, %s88
      %p102 = scmp.eq.s32.totalorder %s28, 1
      %p103 = por %p101, %p102
      %p105 = scmp.ne.s32.totalorder %s88, %s104
      %p106 = scmp.eq.s32.totalorder %s28, 0
      %p107 = por %p105, %p106
      %s109 = sadd.s32 %s108, 1
      %p112 = scmp.eq.s32.totalorder %s22, 1
      %p113 = scmp.ne.s32.totalorder %s108, %s110
      %p114 = scmp.eq.s32.totalorder %s22, 0
      %p115 = por %p113, %p114
      %p116 = scmp.ne.s32.totalorder %s108, %s110
      %p117 = scmp.eq.s32.totalorder %s27, 1
      %p118 = por %p116, %p117
      %p119 = scmp.ne.s32.totalorder %s110, %s111
      %p120 = scmp.eq.s32.totalorder %s27, 0
      %p121 = por %p119, %p120
      %p122 = scmp.ne.s32.totalorder %s110, %s111
      %p123 = scmp.eq.s32.totalorder %s28, 1
      %p124 = por %p122, %p123
      %p126 = scmp.ne.s32.totalorder %s111, %s125
      %p127 = scmp.eq.s32.totalorder %s28, 0
      %p128 = por %p126, %p127
      %s130 = sadd.s32 %s129, 1
      %p133 = scmp.eq.s32.totalorder %s22, 1
      %p134 = scmp.ne.s32.totalorder %s129, %s131
      %p135 = scmp.eq.s32.totalorder %s22, 0
      %p136 = por %p134, %p135
      %p137 = scmp.ne.s32.totalorder %s129, %s131
      %p138 = scmp.eq.s32.totalorder %s27, 1
      %p139 = por %p137, %p138
      %p140 = scmp.ne.s32.totalorder %s131, %s132
      %p141 = scmp.eq.s32.totalorder %s27, 0
      %p142 = por %p140, %p141
      %p143 = scmp.ne.s32.totalorder %s131, %s132
      %p144 = scmp.eq.s32.totalorder %s28, 1
      %p145 = por %p143, %p144
      %p147 = scmp.ne.s32.totalorder %s132, %s146
      %p148 = scmp.eq.s32.totalorder %s28, 0
      %p149 = por %p147, %p148
      %s151 = sadd.s32 %s150, 1
      %p154 = scmp.eq.s32.totalorder %s22, 1
      %p155 = scmp.ne.s32.totalorder %s150, %s152
      %p156 = scmp.eq.s32.totalorder %s22, 0
      %p157 = por %p155, %p156
      %p158 = scmp.ne.s32.totalorder %s150, %s152
      %p159 = scmp.eq.s32.totalorder %s27, 1
      %p160 = por %p158, %p159
      %p161 = scmp.ne.s32.totalorder %s152, %s153
      %p162 = scmp.eq.s32.totalorder %s27, 0
      %p163 = por %p161, %p162
      %p164 = scmp.ne.s32.totalorder %s152, %s153
      %p165 = scmp.eq.s32.totalorder %s28, 1
      %p166 = por %p164, %p165
      %p168 = scmp.ne.s32.totalorder %s153, %s167
      %p169 = scmp.eq.s32.totalorder %s28, 0
      %p170 = por %p168, %p169
      %s172 = sadd.s32 %s171, 1
      %p175 = scmp.eq.s32.totalorder %s22, 1
      %p176 = scmp.ne.s32.totalorder %s171, %s173
      %p177 = scmp.eq.s32.totalorder %s22, 0
      %p178 = por %p176, %p177
      %p179 = scmp.ne.s32.totalorder %s171, %s173
      %p180 = scmp.eq.s32.totalorder %s27, 1
      %p181 = por %p179, %p180
      %p182 = scmp.ne.s32.totalorder %s173, %s174
      %p183 = scmp.eq.s32.totalorder %s27, 0
      %p184 = por %p182, %p183
      %p185 = scmp.ne.s32.totalorder %s173, %s174
      %p186 = scmp.eq.s32.totalorder %s28, 1
      %p187 = por %p185, %p186
      %p189 = scmp.ne.s32.totalorder %s174, %s188
      %p190 = scmp.eq.s32.totalorder %s28, 0
      %p191 = por %p189, %p190
      %s193 = sadd.s32 %s192, 1
      %p196 = scmp.eq.s32.totalorder %s22, 1
      %p197 = scmp.ne.s32.totalorder %s192, %s194
      %p198 = scmp.eq.s32.totalorder %s22, 0
      %p199 = por %p197, %p198
      %p200 = scmp.ne.s32.totalorder %s192, %s194
      %p201 = scmp.eq.s32.totalorder %s27, 1
      %p202 = por %p200, %p201
      %p203 = scmp.ne.s32.totalorder %s194, %s195
      %p204 = scmp.eq.s32.totalorder %s27, 0
      %p205 = por %p203, %p204
      %p206 = scmp.ne.s32.totalorder %s194, %s195
      %p207 = scmp.eq.s32.totalorder %s28, 1
      %p208 = por %p206, %p207
      %p210 = scmp.ne.s32.totalorder %s195, %s209
      %p211 = scmp.eq.s32.totalorder %s28, 0
      %p212 = por %p210, %p211
      %s214 = sadd.s32 %s213, 1
      %p217 = scmp.eq.s32.totalorder %s22, 1
      %p218 = scmp.ne.s32.totalorder %s213, %s215
      %p219 = scmp.eq.s32.totalorder %s22, 0
      %p220 = por %p218, %p219
      %p221 = scmp.ne.s32.totalorder %s213, %s215
      %p222 = scmp.eq.s32.totalorder %s27, 1
      %p223 = por %p221, %p222
      %p224 = scmp.ne.s32.totalorder %s215, %s216
      %p225 = scmp.eq.s32.totalorder %s27, 0
      %p226 = por %p224, %p225
      %p227 = scmp.ne.s32.totalorder %s215, %s216
      %p228 = scmp.eq.s32.totalorder %s28, 1
      %p229 = por %p227, %p228
      %p231 = scmp.ne.s32.totalorder %s216, %s230
      %p232 = scmp.eq.s32.totalorder %s28, 0
      %p233 = por %p231, %p232
      %s235 = sadd.s32 %s234, 1
      %p238 = scmp.eq.s32.totalorder %s22, 1
      %p239 = scmp.ne.s32.totalorder %s234, %s236
      %p240 = scmp.eq.s32.totalorder %s22, 0
      %p241 = por %p239, %p240
      %p242 = scmp.ne.s32.totalorder %s234, %s236
      %p243 = scmp.eq.s32.totalorder %s27, 1
      %p244 = por %p242, %p243
      %p245 = scmp.ne.s32.totalorder %s236, %s237
      %p246 = scmp.eq.s32.totalorder %s27, 0
      %p247 = por %p245, %p246
      %p248 = scmp.ne.s32.totalorder %s236, %s237
      %p249 = scmp.eq.s32.totalorder %s28, 1
      %p250 = por %p248, %p249
      %p252 = scmp.ne.s32.totalorder %s237, %s251
      %p253 = scmp.eq.s32.totalorder %s28, 0
      %p254 = por %p252, %p253
      %s256 = sadd.s32 %s255, 1
      %p259 = scmp.eq.s32.totalorder %s22, 1
      %p260 = scmp.ne.s32.totalorder %s255, %s257
      %p261 = scmp.eq.s32.totalorder %s22, 0
      %p262 = por %p260, %p261
      %p263 = scmp.ne.s32.totalorder %s255, %s257
      %p264 = scmp.eq.s32.totalorder %s27, 1
      %p265 = por %p263, %p264
      %p266 = scmp.ne.s32.totalorder %s257, %s258
      %p267 = scmp.eq.s32.totalorder %s27, 0
      %p268 = por %p266, %p267
      %p269 = scmp.ne.s32.totalorder %s257, %s258
      %p270 = scmp.eq.s32.totalorder %s28, 1
      %p271 = por %p269, %p270
      %p273 = scmp.ne.s32.totalorder %s258, %s272
      %p274 = scmp.eq.s32.totalorder %s28, 0
      %p275 = por %p273, %p274
      %s276 = ssub.s32 %s22, %s29
      %p277 = scmp.eq.s32.totalorder %s276, 0
      %s279 = sadd.s32 %s278, 1
      %s280 = scalar_select %p277, %s278, %s279
      %p283 = pneg %p277
      %p284 = scmp.eq.s32.totalorder %s22, 1
      %p285 = por %p283, %p284
      %p286 = scmp.ne.s32.totalorder %s278, %s281
      %p287 = scmp.eq.s32.totalorder %s22, 0
      %p288 = por %p286, %p287
      %p289 = scmp.ne.s32.totalorder %s278, %s281
      %p290 = scmp.eq.s32.totalorder %s27, 1
      %p291 = por %p289, %p290
      %p292 = scmp.ne.s32.totalorder %s281, %s282
      %p293 = scmp.eq.s32.totalorder %s27, 0
      %p294 = por %p292, %p293
      %p295 = scmp.ne.s32.totalorder %s281, %s282
      %p296 = scmp.eq.s32.totalorder %s28, 1
      %p297 = por %p295, %p296
      %p299 = scmp.ne.s32.totalorder %s282, %s298
      %p300 = scmp.eq.s32.totalorder %s28, 0
      %p301 = por %p299, %p300
      %p302 = scmp.le.s32.totalorder 1, %s22
      %p303 = scmp.lt.s32.totalorder %s22, 3
      %p304 = pnand %p302, %p303
      %p305 = pneg %p304
      // Predicated region
      $region9: #{tpu_custom_call.1} parent=5 // pred_check
        _
      $region10: #{tpu_custom_call.1} parent=5 // pred_check_branch
        %307 = sbr.rel (%p304) target = $region12
      $region11: #{tpu_custom_call.1} parent=5 // pred_region
        %s308 = ssub.s32 %s22, 1
        // Predicated region
        $region13: #{tpu_custom_call.1} parent=11 // pred_check
          %p309 = pneg %p121
        $region14: #{tpu_custom_call.1} parent=11 // pred_check_branch
          %311 = sbr.rel (%p309) target = $region16
        $region15: #{tpu_custom_call.1} parent=11 // pred_region
          %s313 = ssub.s32 256, 256
          %314 = vsyncadd [#allocation4], %s313
          %s315 = sshll.u32 [#allocation3], 4
          %s316 = int_to_ptr.vmem [resolvable:$true] %s315
          %321 = dma.hbm_to_vmem [thread:$0]  %s3, 256, %s316, [#allocation4], 64, 64, 4
        $region16: #{tpu_custom_call.1} parent=11 // pred_fallthru
          _
        // Predicated region
        $region17: #{tpu_custom_call.1} parent=11 // pred_check
          %p322 = pneg %p142
        $region18: #{tpu_custom_call.1} parent=11 // pred_check_branch
          %324 = sbr.rel (%p322) target = $region20
        $region19: #{tpu_custom_call.1} parent=11 // pred_region
          %s326 = ssub.s32 256, 256
          %327 = vsyncadd [#allocation7], %s326
          %s328 = sshll.u32 [#allocation6], 4
          %s329 = int_to_ptr.vmem [resolvable:$true] %s328
          %334 = dma.hbm_to_vmem [thread:$0]  %s4, 256, %s329, [#allocation7], 64, 64, 4
        $region20: #{tpu_custom_call.1} parent=11 // pred_fallthru
          _
        // Predicated region
        $region21: #{tpu_custom_call.1} parent=11 // pred_check
          %p335 = pneg %p163
        $region22: #{tpu_custom_call.1} parent=11 // pred_check_branch
          %337 = sbr.rel (%p335) target = $region24
        $region23: #{tpu_custom_call.1} parent=11 // pred_region
          %s339 = ssub.s32 256, 256
          %340 = vsyncadd [#allocation7], %s339
          %s341 = sshll.u32 [#allocation8], 4
          %s342 = int_to_ptr.vmem [resolvable:$true] %s341
          %347 = dma.hbm_to_vmem [thread:$0]  %s5, 256, %s342, [#allocation7], 64, 64, 4
        $region24: #{tpu_custom_call.1} parent=11 // pred_fallthru
          _
        // Predicated region
        $region25: #{tpu_custom_call.1} parent=11 // pred_check
          %p348 = pneg %p184
        $region26: #{tpu_custom_call.1} parent=11 // pred_check_branch
          %350 = sbr.rel (%p348) target = $region28
        $region27: #{tpu_custom_call.1} parent=11 // pred_region
          _
        $region28: #{tpu_custom_call.1} parent=11 // pred_fallthru
          _
        // Predicated region
        $region29: #{tpu_custom_call.1} parent=11 // pred_check
          %p351 = pneg %p205
        $region30: #{tpu_custom_call.1} parent=11 // pred_check_branch
          %353 = sbr.rel (%p351) target = $region32
        $region31: #{tpu_custom_call.1} parent=11 // pred_region
          _
        $region32: #{tpu_custom_call.1} parent=11 // pred_fallthru
          _
        // Predicated region
        $region33: #{tpu_custom_call.1} parent=11 // pred_check
          %p354 = pneg %p226
        $region34: #{tpu_custom_call.1} parent=11 // pred_check_branch
          %356 = sbr.rel (%p354) target = $region36
        $region35: #{tpu_custom_call.1} parent=11 // pred_region
          _
        $region36: #{tpu_custom_call.1} parent=11 // pred_fallthru
          _
        // Predicated region
        $region37: #{tpu_custom_call.1} parent=11 // pred_check
          %p357 = pneg %p247
        $region38: #{tpu_custom_call.1} parent=11 // pred_check_branch
          %359 = sbr.rel (%p357) target = $region40
        $region39: #{tpu_custom_call.1} parent=11 // pred_region
          _
        $region40: #{tpu_custom_call.1} parent=11 // pred_fallthru
          _
        // Predicated region
        $region41: #{tpu_custom_call.1} parent=11 // pred_check
          %p360 = pneg %p268
        $region42: #{tpu_custom_call.1} parent=11 // pred_check_branch
          %362 = sbr.rel (%p360) target = $region44
        $region43: #{tpu_custom_call.1} parent=11 // pred_region
          _
        $region44: #{tpu_custom_call.1} parent=11 // pred_fallthru
          _
      $region12: #{tpu_custom_call.1} parent=5 // pred_fallthru
        _
      %p363 = scmp.lt.s32.totalorder %s22, 2
      // Predicated region
      $region45: #{tpu_custom_call.1} parent=5 // pred_check
        %p364 = pneg %p363
      $region46: #{tpu_custom_call.1} parent=5 // pred_check_branch
        %366 = sbr.rel (%p364) target = $region48
      $region47: #{tpu_custom_call.1} parent=5 // pred_region
        // Predicated region
        $region49: #{tpu_custom_call.1} parent=47 // pred_check
          %p367 = pneg %p42
        $region50: #{tpu_custom_call.1} parent=47 // pred_check_branch
          %369 = sbr.rel (%p367) target = $region52
        $region51: #{tpu_custom_call.1} parent=47 // pred_region
          %p370 = scmp.lt.s32.totalorder %s22, 1
          %s371 = scalar_select %p370, %s22, 1
          %s372 = smul.addr %s371, 8
          %s373 = scalar_lea.vmem %s0, %s372
        $region52: #{tpu_custom_call.1} parent=47 // pred_fallthru
          _
        // Predicated region
        $region53: #{tpu_custom_call.1} parent=47 // pred_check
          %p374 = pneg %p68
        $region54: #{tpu_custom_call.1} parent=47 // pred_check_branch
          %376 = sbr.rel (%p374) target = $region56
        $region55: #{tpu_custom_call.1} parent=47 // pred_region
          %p377 = scmp.lt.s32.totalorder %s22, 1
          %s378 = scalar_select %p377, %s22, 1
          %s379 = smul.addr %s378, 8
          %s380 = scalar_lea.vmem %s1, %s379
        $region56: #{tpu_custom_call.1} parent=47 // pred_fallthru
          _
        // Predicated region
        $region57: #{tpu_custom_call.1} parent=47 // pred_check
          %p381 = pneg %p94
        $region58: #{tpu_custom_call.1} parent=47 // pred_check_branch
          %383 = sbr.rel (%p381) target = $region60
        $region59: #{tpu_custom_call.1} parent=47 // pred_region
          %p384 = scmp.lt.s32.totalorder %s22, 1
          %s385 = scalar_select %p384, %s22, 1
          %s386 = smul.addr %s385, 8
          %s387 = scalar_lea.vmem %s2, %s386
        $region60: #{tpu_custom_call.1} parent=47 // pred_fallthru
          _
      $region48: #{tpu_custom_call.1} parent=5 // pred_fallthru
        _
      %p388 = scmp.le.s32.totalorder 1, %s22
      %p389 = scmp.lt.s32.totalorder %s22, 3
      %p390 = pnand %p388, %p389
      %p391 = pneg %p390
      // Predicated region
      $region61: #{tpu_custom_call.1} parent=5 // pred_check
        _
      $region62: #{tpu_custom_call.1} parent=5 // pred_check_branch
        %393 = sbr.rel (%p390) target = $region64
      $region63: #{tpu_custom_call.1} parent=5 // pred_region
        %s394 = ssub.s32 %s22, 1
        // Predicated region
        $region65: #{tpu_custom_call.1} parent=63 // pred_check
          %p395 = pneg %p121
        $region66: #{tpu_custom_call.1} parent=63 // pred_check_branch
          %397 = sbr.rel (%p395) target = $region68
        $region67: #{tpu_custom_call.1} parent=63 // pred_region
          %398 = dma.done [#allocation4], 256
        $region68: #{tpu_custom_call.1} parent=63 // pred_fallthru
          _
        // Predicated region
        $region69: #{tpu_custom_call.1} parent=63 // pred_check
          %p399 = pneg %p142
        $region70: #{tpu_custom_call.1} parent=63 // pred_check_branch
          %401 = sbr.rel (%p399) target = $region72
        $region71: #{tpu_custom_call.1} parent=63 // pred_region
          %402 = dma.done [#allocation7], 256
        $region72: #{tpu_custom_call.1} parent=63 // pred_fallthru
          _
        // Predicated region
        $region73: #{tpu_custom_call.1} parent=63 // pred_check
          %p403 = pneg %p163
        $region74: #{tpu_custom_call.1} parent=63 // pred_check_branch
          %405 = sbr.rel (%p403) target = $region76
        $region75: #{tpu_custom_call.1} parent=63 // pred_region
          %406 = dma.done [#allocation7], 256
        $region76: #{tpu_custom_call.1} parent=63 // pred_fallthru
          _
        %p407 = scmp.lt.s32.totalorder %s27, 1
        %s408 = scalar_select %p407, %s27, 1
        %s409 = smul.addr %s408, 8
        %s410 = scalar_lea.vmem %s0, %s409
        %p411 = pneg %p48
        %p412 = pneg %p45
        %p413 = scmp.lt.s32.totalorder %s27, 1
        %s414 = scalar_select %p413, %s27, 1
        %s415 = smul.addr %s414, 8
        %s416 = scalar_lea.vmem %s1, %s415
        %p417 = pneg %p74
        %p418 = pneg %p71
        %p419 = scmp.lt.s32.totalorder %s27, 1
        %s420 = scalar_select %p419, %s27, 1
        %s421 = smul.addr %s420, 8
        %s422 = scalar_lea.vmem %s2, %s421
        %p423 = pneg %p100
        %p424 = pneg %p97
        %p425 = pneg %p121
        %p426 = pneg %p118
        %p427 = pneg %p142
        %p428 = pneg %p139
        %p429 = pneg %p163
        %p430 = pneg %p160
        %p431 = pneg %p184
        %p432 = pneg %p181
        %p433 = pneg %p205
        %p434 = pneg %p202
        %p435 = pneg %p226
        %p436 = pneg %p223
        %p437 = pneg %p247
        %p438 = pneg %p244
        %p439 = pneg %p268
        %p440 = pneg %p265
        %p441 = pneg %p294
        %p442 = pneg %p291
        %s443 = sand.u32 %s281, 1
        %s444 = scalar_lea.sflag [#allocation5], %s443
        %s445 = sand.u32 %s281, 1
        %s446 = smul.addr %s445, 8
        %s447 = scalar_lea.vmem [#allocation9], %s446
        %p448 = scmp.lt.s32.totalorder %s27, 1
        %s449 = scalar_select %p448, %s27, 1
        %s450 = smul.addr %s449, 8
        %s451 = scalar_lea.vmem %s0, %s450
        %p452 = scmp.lt.s32.totalorder %s27, 1
        %s453 = scalar_select %p452, %s27, 1
        %s454 = smul.addr %s453, 8
        %s455 = scalar_lea.vmem %s1, %s454
        %p456 = scmp.lt.s32.totalorder %s27, 1
        %s457 = scalar_select %p456, %s27, 1
        %s458 = smul.addr %s457, 8
        %s459 = scalar_lea.vmem %s2, %s458
        %v461 = vld [vmem:[%s451] sm:$0xff]
        %v462 = vpack.c.bf16 %v461, %v461
        %v463 = vld [vmem:[%s455] sm:$0xff]
        %v464 = vpack.c.bf16 %v463, %v463
        %v465 = vld [vmem:[%s459] sm:$0xff]
        %v466 = vpack.c.bf16 %v465, %v465
        %v467 = vld [vmem:[#allocation3] sm:$0xf]
        %v468 = vld [vmem:[#allocation3 + $0x4] sm:$0xf]
        %v469 = vld [vmem:[#allocation3 + $0x8] sm:$0xf]
        %v470 = vld [vmem:[#allocation3 + $0xc] sm:$0xf]
        %v471 = vld [vmem:[%s6] sm:$0x1]
        %v473 = vlaneseq
        %v474 = vshrl.u32 %v473, 7
        %v475 = vsub.s32 0, %v474
        %v476 = vrot.slane %v471, %v475
        %v482 = vunpack.c.l.b16 %v467
        %v483 = vunpack.c.l.b16 %v468
        %v484 = vunpack.c.l.b16 %v469
        %v485 = vunpack.c.l.b16 %v470
        %v486 = vpack.c.b16 %v483, %v482
        %v487 = vpack.c.b16 %v485, %v484
        %vm490 = vcmask 261120
        %v492 = vsel %vm490, %v462, 0
        %494 = vmatprep.subr.bf16.mxu0 0
        %495 = vmatpush1.bf16.msra.mxu0 %v486
        %496 = vmatprep.subr.bf16.mxu0 0
        %497 = vmatpush1.bf16.msra.mxu0 %v487
        %498 = vmatprep.subr.bf16.mxu0 0
        %499 = vmatpush1.bf16.msra.mxu0 0
        %500 = vmatprep.subr.bf16.mxu0 0
        %501 = vmatpush1.bf16.msra.mxu0 0
        %502 = vmatprep.subr.bf16.mxu0 0
        %503 = vmatpush1.bf16.msra.mxu0 0
        %504 = vmatprep.subr.bf16.mxu0 0
        %505 = vmatpush1.bf16.msra.mxu0 0
        %506 = vmatprep.subr.bf16.mxu0 0
        %507 = vmatpush1.bf16.msra.mxu0 0
        %508 = vmatprep.subr.bf16.mxu0 0
        %509 = vmatpush1.bf16.msra.mxu0 0
        %510 = vmatprep.subr.bf16.mxu0 0
        %511 = vmatpush1.bf16.msra.mxu0 0
        %512 = vmatprep.subr.bf16.mxu0 0
        %513 = vmatpush1.bf16.msra.mxu0 0
        %514 = vmatprep.subr.bf16.mxu0 0
        %515 = vmatpush1.bf16.msra.mxu0 0
        %516 = vmatprep.subr.bf16.mxu0 0
        %517 = vmatpush1.bf16.msra.mxu0 0
        %518 = vmatprep.subr.bf16.mxu0 0
        %519 = vmatpush1.bf16.msra.mxu0 0
        %520 = vmatprep.subr.bf16.mxu0 0
        %521 = vmatpush1.bf16.msra.mxu0 0
        %522 = vmatprep.subr.bf16.mxu0 0
        %523 = vmatpush1.bf16.msra.mxu0 0
        %524 = vmatprep.subr.bf16.mxu0 0
        %525 = vmatpush1.bf16.msra.mxu0 0
        %526 = vmatprep.mubr.bf16.mxu0 0
        %527 = vmatmul.mubr.bf16.gmra.mrb[0].mxu0 %v492
        %v528 = vpop.f32.mrb[0].mxu0
        %v529 = vadd.f32 %v476, %v528
        %v530 = vpop.f32.mrb[0].mxu0
        %v531 = vpop.f32.mrb[0].mxu0
        %v532 = vpop.f32.mrb[0].mxu0
        %533 = vdwg.mxu0
        %v534 = vld [vmem:[#allocation6] sm:$0xf]
        %v535 = vld [vmem:[#allocation6 + $0x4] sm:$0xf]
        %v536 = vld [vmem:[#allocation6 + $0x8] sm:$0xf]
        %v537 = vld [vmem:[#allocation6 + $0xc] sm:$0xf]
        %v538 = vld [vmem:[%s7] sm:$0x1]
        %v540 = vlaneseq
        %v541 = vshrl.u32 %v540, 7
        %v542 = vsub.s32 0, %v541
        %v543 = vrot.slane %v538, %v542
        %v549 = vunpack.c.l.b16 %v534
        %v550 = vunpack.c.l.b16 %v535
        %v551 = vunpack.c.l.b16 %v536
        %v552 = vunpack.c.l.b16 %v537
        %v553 = vpack.c.b16 %v550, %v549
        %v554 = vpack.c.b16 %v552, %v551
        %v558 = vsel %vm490, %v464, 0
        %560 = vmatprep.subr.bf16.mxu0 0
        %561 = vmatpush1.bf16.msra.mxu0 %v553
        %562 = vmatprep.subr.bf16.mxu0 0
        %563 = vmatpush1.bf16.msra.mxu0 %v554
        %564 = vmatprep.subr.bf16.mxu0 0
        %565 = vmatpush1.bf16.msra.mxu0 0
        %566 = vmatprep.subr.bf16.mxu0 0
        %567 = vmatpush1.bf16.msra.mxu0 0
        %568 = vmatprep.subr.bf16.mxu0 0
        %569 = vmatpush1.bf16.msra.mxu0 0
        %570 = vmatprep.subr.bf16.mxu0 0
        %571 = vmatpush1.bf16.msra.mxu0 0
        %572 = vmatprep.subr.bf16.mxu0 0
        %573 = vmatpush1.bf16.msra.mxu0 0
        %574 = vmatprep.subr.bf16.mxu0 0
        %575 = vmatpush1.bf16.msra.mxu0 0
        %576 = vmatprep.subr.bf16.mxu0 0
        %577 = vmatpush1.bf16.msra.mxu0 0
        %578 = vmatprep.subr.bf16.mxu0 0
        %579 = vmatpush1.bf16.msra.mxu0 0
        %580 = vmatprep.subr.bf16.mxu0 0
        %581 = vmatpush1.bf16.msra.mxu0 0
        %582 = vmatprep.subr.bf16.mxu0 0
        %583 = vmatpush1.bf16.msra.mxu0 0
        %584 = vmatprep.subr.bf16.mxu0 0
        %585 = vmatpush1.bf16.msra.mxu0 0
        %586 = vmatprep.subr.bf16.mxu0 0
        %587 = vmatpush1.bf16.msra.mxu0 0
        %588 = vmatprep.subr.bf16.mxu0 0
        %589 = vmatpush1.bf16.msra.mxu0 0
        %590 = vmatprep.subr.bf16.mxu0 0
        %591 = vmatpush1.bf16.msra.mxu0 0
        %592 = vmatprep.mubr.bf16.mxu0 0
        %593 = vmatmul.mubr.bf16.gmra.mrb[0].mxu0 %v558
        %v594 = vpop.f32.mrb[0].mxu0
        %v595 = vadd.f32 %v543, %v594
        %v596 = vpop.f32.mrb[0].mxu0
        %v597 = vpop.f32.mrb[0].mxu0
        %v598 = vpop.f32.mrb[0].mxu0
        %599 = vdwg.mxu0
        %v600 = vld [vmem:[#allocation8] sm:$0xf]
        %v601 = vld [vmem:[#allocation8 + $0x4] sm:$0xf]
        %v602 = vld [vmem:[#allocation8 + $0x8] sm:$0xf]
        %v603 = vld [vmem:[#allocation8 + $0xc] sm:$0xf]
        %v604 = vld [vmem:[%s8] sm:$0x1]
        %v606 = vlaneseq
        %v607 = vshrl.u32 %v606, 7
        %v608 = vsub.s32 0, %v607
        %v609 = vrot.slane %v604, %v608
        %v615 = vunpack.c.l.b16 %v600
        %v616 = vunpack.c.l.b16 %v601
        %v617 = vunpack.c.l.b16 %v602
        %v618 = vunpack.c.l.b16 %v603
        %v619 = vpack.c.b16 %v616, %v615
        %v620 = vpack.c.b16 %v618, %v617
        %v624 = vsel %vm490, %v466, 0
        %626 = vmatprep.subr.bf16.mxu0 0
        %627 = vmatpush1.bf16.msra.mxu0 %v619
        %628 = vmatprep.subr.bf16.mxu0 0
        %629 = vmatpush1.bf16.msra.mxu0 %v620
        %630 = vmatprep.subr.bf16.mxu0 0
        %631 = vmatpush1.bf16.msra.mxu0 0
        %632 = vmatprep.subr.bf16.mxu0 0
        %633 = vmatpush1.bf16.msra.mxu0 0
        %634 = vmatprep.subr.bf16.mxu0 0
        %635 = vmatpush1.bf16.msra.mxu0 0
        %636 = vmatprep.subr.bf16.mxu0 0
        %637 = vmatpush1.bf16.msra.mxu0 0
        %638 = vmatprep.subr.bf16.mxu0 0
        %639 = vmatpush1.bf16.msra.mxu0 0
        %640 = vmatprep.subr.bf16.mxu0 0
        %641 = vmatpush1.bf16.msra.mxu0 0
        %642 = vmatprep.subr.bf16.mxu0 0
        %643 = vmatpush1.bf16.msra.mxu0 0
        %644 = vmatprep.subr.bf16.mxu0 0
        %645 = vmatpush1.bf16.msra.mxu0 0
        %646 = vmatprep.subr.bf16.mxu0 0
        %647 = vmatpush1.bf16.msra.mxu0 0
        %648 = vmatprep.subr.bf16.mxu0 0
        %649 = vmatpush1.bf16.msra.mxu0 0
        %650 = vmatprep.subr.bf16.mxu0 0
        %651 = vmatpush1.bf16.msra.mxu0 0
        %652 = vmatprep.subr.bf16.mxu0 0
        %653 = vmatpush1.bf16.msra.mxu0 0
        %654 = vmatprep.subr.bf16.mxu0 0
        %655 = vmatpush1.bf16.msra.mxu0 0
        %656 = vmatprep.subr.bf16.mxu0 0
        %657 = vmatpush1.bf16.msra.mxu0 0
        %658 = vmatprep.mubr.bf16.mxu0 0
        %659 = vmatmul.mubr.bf16.gmra.mrb[0].mxu0 %v624
        %v660 = vpop.f32.mrb[0].mxu0
        %v661 = vadd.f32 %v609, %v660
        %v662 = vpop.f32.mrb[0].mxu0
        %v663 = vpop.f32.mrb[0].mxu0
        %v664 = vpop.f32.mrb[0].mxu0
        %665 = vdwg.mxu0
        %v666 = vmul.f32 %v529, 0.25
        %v667 = vpack.c.bf16 %v666, %v666
        %v668 = vpack.c.bf16 %v595, %v595
        %v669 = vpack.c.bf16 %v661, %v661
        %vm670 = vcmask 130048
        %v672 = vsel %vm670, %v667, 0
        %v675 = vsel %vm670, %v668, 0
        %677 = vmatprep.subr.bf16.mxu0 0
        %678 = vmatpush1.bf16.xpose.msra.mxu0 %v675
        %679 = vmatprep.subr.bf16.mxu0 0
        %680 = vmatpush1.bf16.xpose.msra.mxu0 0
        %681 = vmatprep.subr.bf16.mxu0 0
        %682 = vmatpush1.bf16.xpose.msra.mxu0 0
        %683 = vmatprep.subr.bf16.mxu0 0
        %684 = vmatpush1.bf16.xpose.msra.mxu0 0
        %685 = vmatprep.subr.bf16.mxu0 0
        %686 = vmatpush1.bf16.xpose.msra.mxu0 0
        %687 = vmatprep.subr.bf16.mxu0 0
        %688 = vmatpush1.bf16.xpose.msra.mxu0 0
        %689 = vmatprep.subr.bf16.mxu0 0
        %690 = vmatpush1.bf16.xpose.msra.mxu0 0
        %691 = vmatprep.subr.bf16.mxu0 0
        %692 = vmatpush1.bf16.xpose.msra.mxu0 0
        %693 = vmatprep.subr.bf16.mxu0 0
        %694 = vmatpush1.bf16.xpose.msra.mxu0 0
        %695 = vmatprep.subr.bf16.mxu0 0
        %696 = vmatpush1.bf16.xpose.msra.mxu0 0
        %697 = vmatprep.subr.bf16.mxu0 0
        %698 = vmatpush1.bf16.xpose.msra.mxu0 0
        %699 = vmatprep.subr.bf16.mxu0 0
        %700 = vmatpush1.bf16.xpose.msra.mxu0 0
        %701 = vmatprep.subr.bf16.mxu0 0
        %702 = vmatpush1.bf16.xpose.msra.mxu0 0
        %703 = vmatprep.subr.bf16.mxu0 0
        %704 = vmatpush1.bf16.xpose.msra.mxu0 0
        %705 = vmatprep.subr.bf16.mxu0 0
        %706 = vmatpush1.bf16.xpose.msra.mxu0 0
        %707 = vmatprep.subr.bf16.mxu0 0
        %708 = vmatpush1.bf16.xpose.msra.mxu0 0
        %709 = vmatprep.mubr.bf16.mxu0 0
        %710 = vmatmul.mubr.bf16.gmra.mrb[0].mxu0 %v672
        %v711 = vpop.f32.mrb[0].mxu0
        %v712 = vadd.f32 0.0, %v711
        %v713 = vpop.f32.mrb[0].mxu0
        %v714 = vpop.f32.mrb[0].mxu0
        %v715 = vpop.f32.mrb[0].mxu0
        %716 = vdwg.mxu0
        %vm717 = vcmask 64512
        %v718 = vsel %vm717, %v712, -inf
        %719 = vmax.xlane.f32.xlu0 %v718
        %v720 = vpop.xlane.xlu0 %719
        %v721 = vsub.f32 %v712, %v720
        %v722 = vmul.f32 %v721, 1.442695
        %v723 = vpow.pop %v722
        %v724 = vsel %vm717, %v723, 0.0
        %725 = vadd.xlane.f32.xlu0 %v724
        %v726 = vpop.xlane.xlu0 %725
        %v727 = vrcp.pop %v726
        %v728 = vmul.f32 %v723, %v727
        %v729 = vpack.c.bf16 %v728, %v728
        %v731 = vsel %vm717, %v729, 0
        %vm733 = vcmask 1043456
        %v735 = vsel %vm733, %v669, 0
        %737 = vmatprep.subr.bf16.mxu0 0
        %738 = vmatpush1.bf16.msra.mxu0 %v735
        %739 = vmatprep.subr.bf16.mxu0 0
        %740 = vmatpush1.bf16.msra.mxu0 0
        %741 = vmatprep.subr.bf16.mxu0 0
        %742 = vmatpush1.bf16.msra.mxu0 0
        %743 = vmatprep.subr.bf16.mxu0 0
        %744 = vmatpush1.bf16.msra.mxu0 0
        %745 = vmatprep.subr.bf16.mxu0 0
        %746 = vmatpush1.bf16.msra.mxu0 0
        %747 = vmatprep.subr.bf16.mxu0 0
        %748 = vmatpush1.bf16.msra.mxu0 0
        %749 = vmatprep.subr.bf16.mxu0 0
        %750 = vmatpush1.bf16.msra.mxu0 0
        %751 = vmatprep.subr.bf16.mxu0 0
        %752 = vmatpush1.bf16.msra.mxu0 0
        %753 = vmatprep.subr.bf16.mxu0 0
        %754 = vmatpush1.bf16.msra.mxu0 0
        %755 = vmatprep.subr.bf16.mxu0 0
        %756 = vmatpush1.bf16.msra.mxu0 0
        %757 = vmatprep.subr.bf16.mxu0 0
        %758 = vmatpush1.bf16.msra.mxu0 0
        %759 = vmatprep.subr.bf16.mxu0 0
        %760 = vmatpush1.bf16.msra.mxu0 0
        %761 = vmatprep.subr.bf16.mxu0 0
        %762 = vmatpush1.bf16.msra.mxu0 0
        %763 = vmatprep.subr.bf16.mxu0 0
        %764 = vmatpush1.bf16.msra.mxu0 0
        %765 = vmatprep.subr.bf16.mxu0 0
        %766 = vmatpush1.bf16.msra.mxu0 0
        %767 = vmatprep.subr.bf16.mxu0 0
        %768 = vmatpush1.bf16.msra.mxu0 0
        %769 = vmatprep.mubr.bf16.mxu0 0
        %770 = vmatmul.mubr.bf16.gmra.mrb[0].mxu0 %v731
        %v771 = vpop.f32.mrb[0].mxu0
        %v772 = vadd.f32 0.0, %v771
        %v773 = vpop.f32.mrb[0].mxu0
        %v774 = vpop.f32.mrb[0].mxu0
        %v775 = vpop.f32.mrb[0].mxu0
        %776 = vdwg.mxu0
        %777 = vst.msk [vmem:[#allocation2] sm:$0xff] %vm670, %v772
        %779 = vrot.lane.b32.xlu0 %v667, 112
        %v780 = vpop.permute.xlu0 %779
        %782 = vrot.lane.b32.xlu0 %v668, 112
        %v783 = vpop.permute.xlu0 %782
        %v785 = vsel %vm670, %v780, 0
        %v788 = vsel %vm670, %v783, 0
        %790 = vmatprep.subr.bf16.mxu0 0
        %791 = vmatpush1.bf16.xpose.msra.mxu0 %v788
        %792 = vmatprep.subr.bf16.mxu0 0
        %793 = vmatpush1.bf16.xpose.msra.mxu0 0
        %794 = vmatprep.subr.bf16.mxu0 0
        %795 = vmatpush1.bf16.xpose.msra.mxu0 0
        %796 = vmatprep.subr.bf16.mxu0 0
        %797 = vmatpush1.bf16.xpose.msra.mxu0 0
        %798 = vmatprep.subr.bf16.mxu0 0
        %799 = vmatpush1.bf16.xpose.msra.mxu0 0
        %800 = vmatprep.subr.bf16.mxu0 0
        %801 = vmatpush1.bf16.xpose.msra.mxu0 0
        %802 = vmatprep.subr.bf16.mxu0 0
        %803 = vmatpush1.bf16.xpose.msra.mxu0 0
        %804 = vmatprep.subr.bf16.mxu0 0
        %805 = vmatpush1.bf16.xpose.msra.mxu0 0
        %806 = vmatprep.subr.bf16.mxu0 0
        %807 = vmatpush1.bf16.xpose.msra.mxu0 0
        %808 = vmatprep.subr.bf16.mxu0 0
        %809 = vmatpush1.bf16.xpose.msra.mxu0 0
        %810 = vmatprep.subr.bf16.mxu0 0
        %811 = vmatpush1.bf16.xpose.msra.mxu0 0
        %812 = vmatprep.subr.bf16.mxu0 0
        %813 = vmatpush1.bf16.xpose.msra.mxu0 0
        %814 = vmatprep.subr.bf16.mxu0 0
        %815 = vmatpush1.bf16.xpose.msra.mxu0 0
        %816 = vmatprep.subr.bf16.mxu0 0
        %817 = vmatpush1.bf16.xpose.msra.mxu0 0
        %818 = vmatprep.subr.bf16.mxu0 0
        %819 = vmatpush1.bf16.xpose.msra.mxu0 0
        %820 = vmatprep.subr.bf16.mxu0 0
        %821 = vmatpush1.bf16.xpose.msra.mxu0 0
        %822 = vmatprep.mubr.bf16.mxu0 0
        %823 = vmatmul.mubr.bf16.gmra.mrb[0].mxu0 %v785
        %v824 = vpop.f32.mrb[0].mxu0
        %v825 = vadd.f32 0.0, %v824
        %v826 = vpop.f32.mrb[0].mxu0
        %v827 = vpop.f32.mrb[0].mxu0
        %v828 = vpop.f32.mrb[0].mxu0
        %829 = vdwg.mxu0
        %v830 = vsel %vm717, %v825, -inf
        %831 = vmax.xlane.f32.xlu0 %v830
        %v832 = vpop.xlane.xlu0 %831
        %v833 = vsub.f32 %v825, %v832
        %v834 = vmul.f32 %v833, 1.442695
        %v835 = vpow.pop %v834
        %v836 = vsel %vm717, %v835, 0.0
        %837 = vadd.xlane.f32.xlu0 %v836
        %v838 = vpop.xlane.xlu0 %837
        %v839 = vrcp.pop %v838
        %v840 = vmul.f32 %v835, %v839
        %v841 = vpack.c.bf16 %v840, %v840
        %843 = vrot.lane.b32.xlu0 %v669, 112
        %v844 = vpop.permute.xlu0 %843
        %v846 = vsel %vm717, %v841, 0
        %v849 = vsel %vm733, %v844, 0
        %851 = vmatprep.subr.bf16.mxu0 0
        %852 = vmatpush1.bf16.msra.mxu0 %v849
        %853 = vmatprep.subr.bf16.mxu0 0
        %854 = vmatpush1.bf16.msra.mxu0 0
        %855 = vmatprep.subr.bf16.mxu0 0
        %856 = vmatpush1.bf16.msra.mxu0 0
        %857 = vmatprep.subr.bf16.mxu0 0
        %858 = vmatpush1.bf16.msra.mxu0 0
        %859 = vmatprep.subr.bf16.mxu0 0
        %860 = vmatpush1.bf16.msra.mxu0 0
        %861 = vmatprep.subr.bf16.mxu0 0
        %862 = vmatpush1.bf16.msra.mxu0 0
        %863 = vmatprep.subr.bf16.mxu0 0
        %864 = vmatpush1.bf16.msra.mxu0 0
        %865 = vmatprep.subr.bf16.mxu0 0
        %866 = vmatpush1.bf16.msra.mxu0 0
        %867 = vmatprep.subr.bf16.mxu0 0
        %868 = vmatpush1.bf16.msra.mxu0 0
        %869 = vmatprep.subr.bf16.mxu0 0
        %870 = vmatpush1.bf16.msra.mxu0 0
        %871 = vmatprep.subr.bf16.mxu0 0
        %872 = vmatpush1.bf16.msra.mxu0 0
        %873 = vmatprep.subr.bf16.mxu0 0
        %874 = vmatpush1.bf16.msra.mxu0 0
        %875 = vmatprep.subr.bf16.mxu0 0
        %876 = vmatpush1.bf16.msra.mxu0 0
        %877 = vmatprep.subr.bf16.mxu0 0
        %878 = vmatpush1.bf16.msra.mxu0 0
        %879 = vmatprep.subr.bf16.mxu0 0
        %880 = vmatpush1.bf16.msra.mxu0 0
        %881 = vmatprep.subr.bf16.mxu0 0
        %882 = vmatpush1.bf16.msra.mxu0 0
        %883 = vmatprep.mubr.bf16.mxu0 0
        %884 = vmatmul.mubr.bf16.gmra.mrb[0].mxu0 %v846
        %v885 = vpop.f32.mrb[0].mxu0
        %v886 = vadd.f32 0.0, %v885
        %v887 = vpop.f32.mrb[0].mxu0
        %v888 = vpop.f32.mrb[0].mxu0
        %v889 = vpop.f32.mrb[0].mxu0
        %890 = vdwg.mxu0
        %892 = vrot.lane.b32.xlu0 %v886, 16
        %v893 = vpop.permute.xlu0 %892
        %vm895 = vcmask 261248
        %896 = vst.msk [vmem:[#allocation2] sm:$0xff] %vm895, %v893
        %897 = vrot.lane.b32.xlu0 %v667, 96
        %v898 = vpop.permute.xlu0 %897
        %899 = vrot.lane.b32.xlu0 %v668, 96
        %v900 = vpop.permute.xlu0 %899
        %v902 = vsel %vm670, %v898, 0
        %v905 = vsel %vm670, %v900, 0
        %907 = vmatprep.subr.bf16.mxu0 0
        %908 = vmatpush1.bf16.xpose.msra.mxu0 %v905
        %909 = vmatprep.subr.bf16.mxu0 0
        %910 = vmatpush1.bf16.xpose.msra.mxu0 0
        %911 = vmatprep.subr.bf16.mxu0 0
        %912 = vmatpush1.bf16.xpose.msra.mxu0 0
        %913 = vmatprep.subr.bf16.mxu0 0
        %914 = vmatpush1.bf16.xpose.msra.mxu0 0
        %915 = vmatprep.subr.bf16.mxu0 0
        %916 = vmatpush1.bf16.xpose.msra.mxu0 0
        %917 = vmatprep.subr.bf16.mxu0 0
        %918 = vmatpush1.bf16.xpose.msra.mxu0 0
        %919 = vmatprep.subr.bf16.mxu0 0
        %920 = vmatpush1.bf16.xpose.msra.mxu0 0
        %921 = vmatprep.subr.bf16.mxu0 0
        %922 = vmatpush1.bf16.xpose.msra.mxu0 0
        %923 = vmatprep.subr.bf16.mxu0 0
        %924 = vmatpush1.bf16.xpose.msra.mxu0 0
        %925 = vmatprep.subr.bf16.mxu0 0
        %926 = vmatpush1.bf16.xpose.msra.mxu0 0
        %927 = vmatprep.subr.bf16.mxu0 0
        %928 = vmatpush1.bf16.xpose.msra.mxu0 0
        %929 = vmatprep.subr.bf16.mxu0 0
        %930 = vmatpush1.bf16.xpose.msra.mxu0 0
        %931 = vmatprep.subr.bf16.mxu0 0
        %932 = vmatpush1.bf16.xpose.msra.mxu0 0
        %933 = vmatprep.subr.bf16.mxu0 0
        %934 = vmatpush1.bf16.xpose.msra.mxu0 0
        %935 = vmatprep.subr.bf16.mxu0 0
        %936 = vmatpush1.bf16.xpose.msra.mxu0 0
        %937 = vmatprep.subr.bf16.mxu0 0
        %938 = vmatpush1.bf16.xpose.msra.mxu0 0
        %939 = vmatprep.mubr.bf16.mxu0 0
        %940 = vmatmul.mubr.bf16.gmra.mrb[0].mxu0 %v902
        %v941 = vpop.f32.mrb[0].mxu0
        %v942 = vadd.f32 0.0, %v941
        %v943 = vpop.f32.mrb[0].mxu0
        %v944 = vpop.f32.mrb[0].mxu0
        %v945 = vpop.f32.mrb[0].mxu0
        %946 = vdwg.mxu0
        %v947 = vsel %vm717, %v942, -inf
        %948 = vmax.xlane.f32.xlu0 %v947
        %v949 = vpop.xlane.xlu0 %948
        %v950 = vsub.f32 %v942, %v949
        %v951 = vmul.f32 %v950, 1.442695
        %v952 = vpow.pop %v951
        %v953 = vsel %vm717, %v952, 0.0
        %954 = vadd.xlane.f32.xlu0 %v953
        %v955 = vpop.xlane.xlu0 %954
        %v956 = vrcp.pop %v955
        %v957 = vmul.f32 %v952, %v956
        %v958 = vpack.c.bf16 %v957, %v957
        %959 = vrot.lane.b32.xlu0 %v669, 96
        %v960 = vpop.permute.xlu0 %959
        %v962 = vsel %vm717, %v958, 0
        %v965 = vsel %vm733, %v960, 0
        %967 = vmatprep.subr.bf16.mxu0 0
        %968 = vmatpush1.bf16.msra.mxu0 %v965
        %969 = vmatprep.subr.bf16.mxu0 0
        %970 = vmatpush1.bf16.msra.mxu0 0
        %971 = vmatprep.subr.bf16.mxu0 0
        %972 = vmatpush1.bf16.msra.mxu0 0
        %973 = vmatprep.subr.bf16.mxu0 0
        %974 = vmatpush1.bf16.msra.mxu0 0
        %975 = vmatprep.subr.bf16.mxu0 0
        %976 = vmatpush1.bf16.msra.mxu0 0
        %977 = vmatprep.subr.bf16.mxu0 0
        %978 = vmatpush1.bf16.msra.mxu0 0
        %979 = vmatprep.subr.bf16.mxu0 0
        %980 = vmatpush1.bf16.msra.mxu0 0
        %981 = vmatprep.subr.bf16.mxu0 0
        %982 = vmatpush1.bf16.msra.mxu0 0
        %983 = vmatprep.subr.bf16.mxu0 0
        %984 = vmatpush1.bf16.msra.mxu0 0
        %985 = vmatprep.subr.bf16.mxu0 0
        %986 = vmatpush1.bf16.msra.mxu0 0
        %987 = vmatprep.subr.bf16.mxu0 0
        %988 = vmatpush1.bf16.msra.mxu0 0
        %989 = vmatprep.subr.bf16.mxu0 0
        %990 = vmatpush1.bf16.msra.mxu0 0
        %991 = vmatprep.subr.bf16.mxu0 0
        %992 = vmatpush1.bf16.msra.mxu0 0
        %993 = vmatprep.subr.bf16.mxu0 0
        %994 = vmatpush1.bf16.msra.mxu0 0
        %995 = vmatprep.subr.bf16.mxu0 0
        %996 = vmatpush1.bf16.msra.mxu0 0
        %997 = vmatprep.subr.bf16.mxu0 0
        %998 = vmatpush1.bf16.msra.mxu0 0
        %999 = vmatprep.mubr.bf16.mxu0 0
        %1000 = vmatmul.mubr.bf16.gmra.mrb[0].mxu0 %v962
        %v1001 = vpop.f32.mrb[0].mxu0
        %v1002 = vadd.f32 0.0, %v1001
        %v1003 = vpop.f32.mrb[0].mxu0
        %v1004 = vpop.f32.mrb[0].mxu0
        %v1005 = vpop.f32.mrb[0].mxu0
        %1006 = vdwg.mxu0
        %1008 = vrot.lane.b32.xlu0 %v1002, 32
        %v1009 = vpop.permute.xlu0 %1008
        %vm1011 = vcmask 392448
        %1012 = vst.msk [vmem:[#allocation2] sm:$0xff] %vm1011, %v1009
        %1013 = vrot.lane.b32.xlu0 %v667, 80
        %v1014 = vpop.permute.xlu0 %1013
        %1015 = vrot.lane.b32.xlu0 %v668, 80
        %v1016 = vpop.permute.xlu0 %1015
        %v1018 = vsel %vm670, %v1014, 0
        %v1021 = vsel %vm670, %v1016, 0
        %1023 = vmatprep.subr.bf16.mxu0 0
        %1024 = vmatpush1.bf16.xpose.msra.mxu0 %v1021
        %1025 = vmatprep.subr.bf16.mxu0 0
        %1026 = vmatpush1.bf16.xpose.msra.mxu0 0
        %1027 = vmatprep.subr.bf16.mxu0 0
        %1028 = vmatpush1.bf16.xpose.msra.mxu0 0
        %1029 = vmatprep.subr.bf16.mxu0 0
        %1030 = vmatpush1.bf16.xpose.msra.mxu0 0
        %1031 = vmatprep.subr.bf16.mxu0 0
        %1032 = vmatpush1.bf16.xpose.msra.mxu0 0
        %1033 = vmatprep.subr.bf16.mxu0 0
        %1034 = vmatpush1.bf16.xpose.msra.mxu0 0
        %1035 = vmatprep.subr.bf16.mxu0 0
        %1036 = vmatpush1.bf16.xpose.msra.mxu0 0
        %1037 = vmatprep.subr.bf16.mxu0 0
        %1038 = vmatpush1.bf16.xpose.msra.mxu0 0
        %1039 = vmatprep.subr.bf16.mxu0 0
        %1040 = vmatpush1.bf16.xpose.msra.mxu0 0
        %1041 = vmatprep.subr.bf16.mxu0 0
        %1042 = vmatpush1.bf16.xpose.msra.mxu0 0
        %1043 = vmatprep.subr.bf16.mxu0 0
        %1044 = vmatpush1.bf16.xpose.msra.mxu0 0
        %1045 = vmatprep.subr.bf16.mxu0 0
        %1046 = vmatpush1.bf16.xpose.msra.mxu0 0
        %1047 = vmatprep.subr.bf16.mxu0 0
        %1048 = vmatpush1.bf16.xpose.msra.mxu0 0
        %1049 = vmatprep.subr.bf16.mxu0 0
        %1050 = vmatpush1.bf16.xpose.msra.mxu0 0
        %1051 = vmatprep.subr.bf16.mxu0 0
        %1052 = vmatpush1.bf16.xpose.msra.mxu0 0
        %1053 = vmatprep.subr.bf16.mxu0 0
        %1054 = vmatpush1.bf16.xpose.msra.mxu0 0
        %1055 = vmatprep.mubr.bf16.mxu0 0
        %1056 = vmatmul.mubr.bf16.gmra.mrb[0].mxu0 %v1018
        %v1057 = vpop.f32.mrb[0].mxu0
        %v1058 = vadd.f32 0.0, %v1057
        %v1059 = vpop.f32.mrb[0].mxu0
        %v1060 = vpop.f32.mrb[0].mxu0
        %v1061 = vpop.f32.mrb[0].mxu0
        %1062 = vdwg.mxu0
        %v1063 = vsel %vm717, %v1058, -inf
        %1064 = vmax.xlane.f32.xlu0 %v1063
        %v1065 = vpop.xlane.xlu0 %1064
        %v1066 = vsub.f32 %v1058, %v1065
        %v1067 = vmul.f32 %v1066, 1.442695
        %v1068 = vpow.pop %v1067
        %v1069 = vsel %vm717, %v1068, 0.0
        %1070 = vadd.xlane.f32.xlu0 %v1069
        %v1071 = vpop.xlane.xlu0 %1070
        %v1072 = vrcp.pop %v1071
        %v1073 = vmul.f32 %v1068, %v1072
        %v1074 = vpack.c.bf16 %v1073, %v1073
        %1075 = vrot.lane.b32.xlu0 %v669, 80
        %v1076 = vpop.permute.xlu0 %1075
        %v1078 = vsel %vm717, %v1074, 0
        %v1081 = vsel %vm733, %v1076, 0
        %1083 = vmatprep.subr.bf16.mxu0 0
        %1084 = vmatpush1.bf16.msra.mxu0 %v1081
        %1085 = vmatprep.subr.bf16.mxu0 0
        %1086 = vmatpush1.bf16.msra.mxu0 0
        %1087 = vmatprep.subr.bf16.mxu0 0
        %1088 = vmatpush1.bf16.msra.mxu0 0
        %1089 = vmatprep.subr.bf16.mxu0 0
        %1090 = vmatpush1.bf16.msra.mxu0 0
        %1091 = vmatprep.subr.bf16.mxu0 0
        %1092 = vmatpush1.bf16.msra.mxu0 0
        %1093 = vmatprep.subr.bf16.mxu0 0
        %1094 = vmatpush1.bf16.msra.mxu0 0
        %1095 = vmatprep.subr.bf16.mxu0 0
        %1096 = vmatpush1.bf16.msra.mxu0 0
        %1097 = vmatprep.subr.bf16.mxu0 0
        %1098 = vmatpush1.bf16.msra.mxu0 0
        %1099 = vmatprep.subr.bf16.mxu0 0
        %1100 = vmatpush1.bf16.msra.mxu0 0
        %1101 = vmatprep.subr.bf16.mxu0 0
        %1102 = vmatpush1.bf16.msra.mxu0 0
        %1103 = vmatprep.subr.bf16.mxu0 0
        %1104 = vmatpush1.bf16.msra.mxu0 0
        %1105 = vmatprep.subr.bf16.mxu0 0
        %1106 = vmatpush1.bf16.msra.mxu0 0
        %1107 = vmatprep.subr.bf16.mxu0 0
        %1108 = vmatpush1.bf16.msra.mxu0 0
        %1109 = vmatprep.subr.bf16.mxu0 0
        %1110 = vmatpush1.bf16.msra.mxu0 0
        %1111 = vmatprep.subr.bf16.mxu0 0
        %1112 = vmatpush1.bf16.msra.mxu0 0
        %1113 = vmatprep.subr.bf16.mxu0 0
        %1114 = vmatpush1.bf16.msra.mxu0 0
        %1115 = vmatprep.mubr.bf16.mxu0 0
        %1116 = vmatmul.mubr.bf16.gmra.mrb[0].mxu0 %v1078
        %v1117 = vpop.f32.mrb[0].mxu0
        %v1118 = vadd.f32 0.0, %v1117
        %v1119 = vpop.f32.mrb[0].mxu0
        %v1120 = vpop.f32.mrb[0].mxu0
        %v1121 = vpop.f32.mrb[0].mxu0
        %1122 = vdwg.mxu0
        %1124 = vrot.lane.b32.xlu0 %v1118, 48
        %v1125 = vpop.permute.xlu0 %1124
        %vm1127 = vcmask 523648
        %1128 = vst.msk [vmem:[#allocation2] sm:$0xff] %vm1127, %v1125
        %v1129 = vld [vmem:[#allocation2] sm:$0xff]
        %v1130 = vpack.c.bf16 %v1129, %v1129
        %v1131 = vld [vmem:[%s9] sm:$0xf]
        %v1132 = vld [vmem:[%s9 + $0x4] sm:$0xf]
        %v1133 = vld [vmem:[%s9 + $0x8] sm:$0xf]
        %v1134 = vld [vmem:[%s9 + $0xc] sm:$0xf]
        %v1135 = vld [vmem:[%s9 + $0x10] sm:$0xf]
        %v1136 = vld [vmem:[%s9 + $0x14] sm:$0xf]
        %v1137 = vld [vmem:[%s9 + $0x18] sm:$0xf]
        %v1138 = vld [vmem:[%s9 + $0x1c] sm:$0xf]
        %v1139 = vld [vmem:[%s10] sm:$0x1]
        %v1141 = vlaneseq
        %v1142 = vshrl.u32 %v1141, 7
        %v1143 = vsub.s32 0, %v1142
        %v1144 = vrot.slane %v1139, %v1143
        %v1154 = vunpack.c.l.b16 %v1131
        %v1155 = vunpack.c.l.b16 %v1132
        %v1156 = vunpack.c.l.b16 %v1133
        %v1157 = vunpack.c.l.b16 %v1134
        %v1158 = vunpack.c.l.b16 %v1135
        %v1159 = vunpack.c.l.b16 %v1136
        %v1160 = vunpack.c.l.b16 %v1137
        %v1161 = vunpack.c.l.b16 %v1138
        %v1162 = vpack.c.b16 %v1155, %v1154
        %v1163 = vpack.c.b16 %v1157, %v1156
        %v1164 = vpack.c.b16 %v1159, %v1158
        %v1165 = vpack.c.b16 %v1161, %v1160
        %vm1170 = vcmask 523264
        %v1172 = vsel %vm1170, %v1130, 0
        %1174 = vmatprep.subr.bf16.mxu0 0
        %1175 = vmatpush1.bf16.msra.mxu0 %v1162
        %1176 = vmatprep.subr.bf16.mxu0 0
        %1177 = vmatpush1.bf16.msra.mxu0 %v1163
        %1178 = vmatprep.subr.bf16.mxu0 0
        %1179 = vmatpush1.bf16.msra.mxu0 %v1164
        %1180 = vmatprep.subr.bf16.mxu0 0
        %1181 = vmatpush1.bf16.msra.mxu0 %v1165
        %1182 = vmatprep.subr.bf16.mxu0 0
        %1183 = vmatpush1.bf16.msra.mxu0 0
        %1184 = vmatprep.subr.bf16.mxu0 0
        %1185 = vmatpush1.bf16.msra.mxu0 0
        %1186 = vmatprep.subr.bf16.mxu0 0
        %1187 = vmatpush1.bf16.msra.mxu0 0
        %1188 = vmatprep.subr.bf16.mxu0 0
        %1189 = vmatpush1.bf16.msra.mxu0 0
        %1190 = vmatprep.subr.bf16.mxu0 0
        %1191 = vmatpush1.bf16.msra.mxu0 0
        %1192 = vmatprep.subr.bf16.mxu0 0
        %1193 = vmatpush1.bf16.msra.mxu0 0
        %1194 = vmatprep.subr.bf16.mxu0 0
        %1195 = vmatpush1.bf16.msra.mxu0 0
        %1196 = vmatprep.subr.bf16.mxu0 0
        %1197 = vmatpush1.bf16.msra.mxu0 0
        %1198 = vmatprep.subr.bf16.mxu0 0
        %1199 = vmatpush1.bf16.msra.mxu0 0
        %1200 = vmatprep.subr.bf16.mxu0 0
        %1201 = vmatpush1.bf16.msra.mxu0 0
        %1202 = vmatprep.subr.bf16.mxu0 0
        %1203 = vmatpush1.bf16.msra.mxu0 0
        %1204 = vmatprep.subr.bf16.mxu0 0
        %1205 = vmatpush1.bf16.msra.mxu0 0
        %1206 = vmatprep.mubr.bf16.mxu0 0
        %1207 = vmatmul.mubr.bf16.gmra.mrb[0].mxu0 %v1172
        %v1208 = vpop.f32.mrb[0].mxu0
        %v1209 = vadd.f32 %v1144, %v1208
        %v1210 = vpop.f32.mrb[0].mxu0
        %v1211 = vpop.f32.mrb[0].mxu0
        %v1212 = vpop.f32.mrb[0].mxu0
        %1213 = vdwg.mxu0
        %1214 = vst.msk [vmem:[%s447] sm:$0xff] %vm490, %v1209
        %s1215 = sand.u32 %s281, 1
        %s1216 = scalar_lea.sflag [#allocation5], %s1215
        %s1217 = sand.u32 %s281, 1
        %s1218 = smul.addr %s1217, 8
        %s1219 = scalar_lea.vmem [#allocation9], %s1218
        // Predicated region
        $region77: #{tpu_custom_call.1} parent=63 // pred_check
          %p1220 = pneg %p291
        $region78: #{tpu_custom_call.1} parent=63 // pred_check_branch
          %1222 = sbr.rel (%p1220) target = $region80
        $region79: #{tpu_custom_call.1} parent=63 // pred_region
          %s1224 = ssub.s32 128, 128
          %1225 = vsyncadd %s1216, %s1224
          %s1226 = smul.addr %s27, 128
          %s1227 = scalar_lea.hbm %s11, %s1226
          %s1229 = sshll.u32 %s1219, 4
          %s1230 = int_to_ptr.vmem [resolvable:$true] %s1229
          %1232 = dma.vmem_to_hbm [thread:$0]  %s1230, 128, %s1227, %s1216
        $region80: #{tpu_custom_call.1} parent=63 // pred_fallthru
          _
      $region64: #{tpu_custom_call.1} parent=5 // pred_fallthru
        _
      %p1233 = scmp.le.s32.totalorder 2, %s22
      // Predicated region
      $region81: #{tpu_custom_call.1} parent=5 // pred_check
        %p1234 = pneg %p1233
      $region82: #{tpu_custom_call.1} parent=5 // pred_check_branch
        %1236 = sbr.rel (%p1234) target = $region84
      $region83: #{tpu_custom_call.1} parent=5 // pred_region
        %s1237 = ssub.s32 %s22, 2
        // Predicated region
        $region85: #{tpu_custom_call.1} parent=83 // pred_check
          %p1238 = pneg %p297
        $region86: #{tpu_custom_call.1} parent=83 // pred_check_branch
          %1240 = sbr.rel (%p1238) target = $region88
        $region87: #{tpu_custom_call.1} parent=83 // pred_region
          %s1241 = sand.u32 %s282, 1
          %s1242 = scalar_lea.sflag [#allocation5], %s1241
          %s1243 = sand.u32 %s282, 1
          %s1244 = smul.addr %s1243, 8
          %s1245 = scalar_lea.vmem [#allocation9], %s1244
          %1246 = dma.done %s1242, 128
        $region88: #{tpu_custom_call.1} parent=83 // pred_fallthru
          _
      $region84: #{tpu_custom_call.1} parent=5 // pred_fallthru
        _
    $region6: #{tpu_custom_call.1} parent=1 // loop_footer
      %s26 = sadd.s32 1, %s22
    $region7: #{tpu_custom_call.1} parent=1 // loop_footer_branch
      %21 = sbr.rel target = $region3
    $region8: #{tpu_custom_call.1} parent=1 // loop_exit
      _
    %1247 = vsyncpa [#allocation4], 1
    %s1248 = scalar_lea.sflag [#allocation4], 1
    %1249 = vsyncpa %s1248, 1
    %1250 = vsyncpa [#allocation7], 1
    %1251 = vsyncpa [#allocation5], 1
    %s1252 = scalar_lea.sflag [#allocation5], 1
    %1253 = vsyncpa %s1252, 1

</llo_original>
